<compile_context>
chip_gen: v6e
topology: v6e:2x2x1
jax: 0.10.0
libtpu: 0.0.40
codegen_flags: <defaults>
</compile_context>

<pallas_src>
import functools

import jax
import jax.numpy as jnp
from jax.experimental import pallas as pl
from jax.experimental.pallas import tpu as pltpu


IN_DIM = 64
HIDDEN_LIST = [256, 256, 256, 256]
OUT_DIM = 3

_LANE = 128


def _round_up(x, m):
    return ((x + m - 1) // m) * m


def _mlp_kernel(*refs):
    """refs = (x_ref, w0, b0, w1, b1, ..., wL, bL, o_ref)."""
    x_ref, o_ref = refs[0], refs[-1]
    param_refs = refs[1:-1]
    n_layers = len(param_refs) // 2

    h = x_ref[...]
    for li in range(n_layers):
        w_ref = param_refs[2 * li]       # bf16 (fan_in, fan_out)
        b_ref = param_refs[2 * li + 1]   # f32  (1, fan_out)
        # MXU: bf16 operands, f32 accumulate.
        h = jnp.dot(h.astype(jnp.bfloat16), w_ref[...],
                    preferred_element_type=jnp.float32)
        # Bias add (and ReLU) in f32 on the VPU.
        h = h + b_ref[...]
        if li < n_layers - 1:
            h = jnp.maximum(h, 0.0)
    o_ref[...] = h.astype(o_ref.dtype)


@functools.partial(jax.jit, static_argnames=("tm",))
def mlp_refiner_forward(x, params, *, tm=1024):
    """Pallas implementation of MLPRefiner.forward.

    Args:
      x: (..., in_dim) input.
      params: list of (weight, bias) pairs; weight is (fan_in, fan_out)
        (transposed vs. PyTorch's (out, in)), bias is (fan_out,) or (1, fan_out).
      tm: maximum row-tile size (rounded to a multiple of 8; shrunk for small
        inputs so the grid keeps >= 2 steps when possible).
    Returns:
      (..., out_dim) output, same dtype as x.
    """
    lead_shape = x.shape[:-1]
    in_dim = x.shape[-1]
    x2d = x.reshape(-1, in_dim)
    n_rows = x2d.shape[0]
    out_dim = params[-1][0].shape[-1]
    n_layers = len(params)

    # ---- choose row tile (all static at trace time) ----
    tm_eff = max(8, min(_round_up(tm, 8), _round_up(n_rows, 8)))
    grid_len = pl.cdiv(n_rows, tm_eff)
    if grid_len == 1 and n_rows > 8:
        # Keep >= 2 grid steps so both TensorCores (v7x) get work.
        tm_eff = _round_up(pl.cdiv(n_rows, 2), 8)
        grid_len = pl.cdiv(n_rows, tm_eff)
    padded_rows = grid_len * tm_eff
    if padded_rows != n_rows:
        x2d = jnp.pad(x2d, ((0, padded_rows - n_rows), (0, 0)))

    # ---- prepare params: bf16 weights, f32 biases, lane-dense last layer ----
    padded_out = _round_up(out_dim, _LANE)
    flat_args = []
    in_specs = [pl.BlockSpec((tm_eff, in_dim), lambda i: (i, 0))]
    for li, (w, b) in enumerate(params):
        w = w.astype(jnp.bfloat16)
        b = b.reshape(1, -1).astype(jnp.float32)
        if li == n_layers - 1 and padded_out != out_dim:
            # Zero-pad the output projection so the kernel's output stores are
            # full 128-lane (unmasked) vst; padded lanes are exactly zero.
            w = jnp.pad(w, ((0, 0), (0, padded_out - out_dim)))
            b = jnp.pad(b, ((0, 0), (0, padded_out - out_dim)))
        flat_args.append(w)
        flat_args.append(b)
        # Weights/biases are full-array blocks with a constant index_map, so
        # they stay VMEM-resident across every grid step (no re-DMA).
        in_specs.append(pl.BlockSpec(w.shape, lambda i: (0, 0)))
        in_specs.append(pl.BlockSpec(b.shape, lambda i: (0, 0)))

    # ---- advisory cost estimate for XLA's scheduler ----
    widths = [w.shape[1] for (w, _) in params]
    widths[-1] = padded_out
    dims = [in_dim] + widths
    flops = 2 * padded_rows * sum(a * b for a, b in zip(dims[:-1], dims[1:]))
    bytes_accessed = (
        int(x2d.size) * x2d.dtype.itemsize
        + padded_rows * padded_out * jnp.dtype(x.dtype).itemsize
        + sum(int(a.size) * a.dtype.itemsize for a in flat_args))

    out = pl.pallas_call(
        _mlp_kernel,
        out_shape=jax.ShapeDtypeStruct((padded_rows, padded_out), x.dtype),
        grid_spec=pltpu.PrefetchScalarGridSpec(
            num_scalar_prefetch=0,
            grid=(grid_len,),
            in_specs=in_specs,
            out_specs=pl.BlockSpec((tm_eff, padded_out), lambda i: (i, 0)),
        ),
        compiler_params=pltpu.CompilerParams(
            dimension_semantics=("parallel",)),
        cost_estimate=pl.CostEstimate(
            flops=flops, transcendentals=0, bytes_accessed=bytes_accessed),
    )(x2d, *flat_args)

    # Drop padded rows / padded output lanes before returning.
    out = out[:n_rows, :out_dim]
    return out.reshape(*lead_shape, out_dim)


def init_params(key, in_dim=IN_DIM, hidden_list=HIDDEN_LIST, out_dim=OUT_DIM,
                weight_dtype=jnp.bfloat16, bias_dtype=jnp.float32):
    """Deterministic init mimicking torch.nn.Linear default (U[-1/sqrt(fan_in), +])."""
    dims = [in_dim] + list(hidden_list) + [out_dim]
    params = []
    for fan_in, fan_out in zip(dims[:-1], dims[1:]):
        kw, kb, key = jax.random.split(key, 3)
        bound = 1.0 / float(fan_in) ** 0.5
        # Stored as (fan_in, fan_out) so the kernel can do x @ w directly.
        w = jax.random.uniform(kw, (fan_in, fan_out), dtype=jnp.float32,
                               minval=-bound, maxval=bound).astype(weight_dtype)
        b = jax.random.uniform(kb, (1, fan_out), dtype=jnp.float32,
                               minval=-bound, maxval=bound).astype(bias_dtype)
        params.append((w, b))
    return params


def mlp_refiner_reference(x, params):
    """Pure-JAX reference mirroring the kernel's numerics (bf16 MXU, f32 acc)."""
    lead_shape = x.shape[:-1]
    h = x.reshape(-1, x.shape[-1]).astype(jnp.float32)
    n = len(params)
    for i, (w, b) in enumerate(params):
        h = jnp.dot(h.astype(jnp.bfloat16), w.astype(jnp.bfloat16),
                    preferred_element_type=jnp.float32)
        h = h + b.reshape(1, -1).astype(jnp.float32)
        if i < n - 1:
            h = jnp.maximum(h, 0.0)
    return h.astype(x.dtype).reshape(*lead_shape, -1)


if __name__ == "__main__":
    key = jax.random.PRNGKey(0)
    k_x, k_x2, k_p = jax.random.split(key, 3)
    params = init_params(k_p)

    # LIIF-style input: (batch, n_query_points, in_dim) = (2, 64, 64)
    # -> 128 flattened rows -> adaptive tile tm_eff=64, grid=2.
    x = jax.random.normal(k_x, (2, 64, IN_DIM), dtype=jnp.float32)
    out = jax.block_until_ready(mlp_refiner_forward(x, params))
    ref = mlp_refiner_reference(x, params)
    assert out.shape == (2, 64, OUT_DIM), out.shape
    assert jnp.allclose(out, ref, atol=2e-2, rtol=2e-2), \
        float(jnp.max(jnp.abs(out - ref)))

    # Ragged row count (150 rows) exercises the row-padding path.
    x2 = jax.random.normal(k_x2, (3, 50, IN_DIM), dtype=jnp.float32)
    out2 = jax.block_until_ready(mlp_refiner_forward(x2, params))
    ref2 = mlp_refiner_reference(x2, params)
    assert out2.shape == (3, 50, OUT_DIM), out2.shape
    assert jnp.allclose(out2, ref2, atol=2e-2, rtol=2e-2), \
        float(jnp.max(jnp.abs(out2 - ref2)))

    print("KERNEL_OK")
</pallas_src>

<mosaic_0001>
module attributes {stable_mosaic.version = 11 : i64} {
  func.func @_mlp_kernel(%arg0: i32, %arg1: memref<64x64xf32, #tpu.memory_space<vmem>>, %arg2: memref<64x256xbf16, #tpu.memory_space<vmem>>, %arg3: memref<1x256xf32, #tpu.memory_space<vmem>>, %arg4: memref<256x256xbf16, #tpu.memory_space<vmem>>, %arg5: memref<1x256xf32, #tpu.memory_space<vmem>>, %arg6: memref<256x256xbf16, #tpu.memory_space<vmem>>, %arg7: memref<1x256xf32, #tpu.memory_space<vmem>>, %arg8: memref<256x256xbf16, #tpu.memory_space<vmem>>, %arg9: memref<1x256xf32, #tpu.memory_space<vmem>>, %arg10: memref<256x128xbf16, #tpu.memory_space<vmem>>, %arg11: memref<1x128xf32, #tpu.memory_space<vmem>>, %arg12: memref<64x128xf32, #tpu.memory_space<vmem>>) attributes {dimension_semantics = [#tpu.dimension_semantics<parallel>], iteration_bounds = array<i64: 2>, scalar_prefetch = 0 : i64, scratch_operands = 0 : i64, tpu.core_type = #tpu.core_type<tc>, window_params = [{transform_indices = @transform_0, window_bounds = array<i64: 64, 64>}, {pipeline_mode = #tpu.pipeline_mode<synchronous>, transform_indices = @transform_1, window_bounds = array<i64: 64, 256>}, {pipeline_mode = #tpu.pipeline_mode<synchronous>, transform_indices = @transform_2, window_bounds = array<i64: 1, 256>}, {pipeline_mode = #tpu.pipeline_mode<synchronous>, transform_indices = @transform_3, window_bounds = array<i64: 256, 256>}, {pipeline_mode = #tpu.pipeline_mode<synchronous>, transform_indices = @transform_4, window_bounds = array<i64: 1, 256>}, {pipeline_mode = #tpu.pipeline_mode<synchronous>, transform_indices = @transform_5, window_bounds = array<i64: 256, 256>}, {pipeline_mode = #tpu.pipeline_mode<synchronous>, transform_indices = @transform_6, window_bounds = array<i64: 1, 256>}, {pipeline_mode = #tpu.pipeline_mode<synchronous>, transform_indices = @transform_7, window_bounds = array<i64: 256, 256>}, {pipeline_mode = #tpu.pipeline_mode<synchronous>, transform_indices = @transform_8, window_bounds = array<i64: 1, 256>}, {pipeline_mode = #tpu.pipeline_mode<synchronous>, transform_indices = @transform_9, window_bounds = array<i64: 256, 128>}, {pipeline_mode = #tpu.pipeline_mode<synchronous>, transform_indices = @transform_10, window_bounds = array<i64: 1, 128>}, {transform_indices = @transform_11, window_bounds = array<i64: 64, 128>}]} {
    %c0 = arith.constant 0 : index
    %c0_0 = arith.constant 0 : index
    %0 = vector.load %arg1[%c0, %c0_0] : memref<64x64xf32, #tpu.memory_space<vmem>>, vector<64x64xf32>
    %1 = arith.truncf %0 : vector<64x64xf32> to vector<64x64xbf16>
    %c0_1 = arith.constant 0 : index
    %c0_2 = arith.constant 0 : index
    %2 = vector.load %arg2[%c0_1, %c0_2] : memref<64x256xbf16, #tpu.memory_space<vmem>>, vector<64x256xbf16>
    %cst = arith.constant dense<0.000000e+00> : vector<64x256xf32>
    %3 = tpu.matmul %1, %2, %cst {dimension_numbers = #tpu.dot_dimension_numbers<[1], [0], [0], [1], [0, 0, 1, 1], [], []>} : vector<64x64xbf16>, vector<64x256xbf16>, vector<64x256xf32> -> vector<64x256xf32>
    %c0_3 = arith.constant 0 : index
    %c0_4 = arith.constant 0 : index
    %4 = vector.load %arg3[%c0_3, %c0_4] : memref<1x256xf32, #tpu.memory_space<vmem>>, vector<1x256xf32>
    %5 = vector.broadcast %4 : vector<1x256xf32> to vector<64x256xf32>
    %6 = arith.addf %3, %5 : vector<64x256xf32>
    %cst_5 = arith.constant 0.000000e+00 : f32
    %7 = vector.broadcast %cst_5 : f32 to vector<64x256xf32>
    %8 = arith.maximumf %6, %7 : vector<64x256xf32>
    %9 = arith.truncf %8 : vector<64x256xf32> to vector<64x256xbf16>
    %c0_6 = arith.constant 0 : index
    %c0_7 = arith.constant 0 : index
    %10 = vector.load %arg4[%c0_6, %c0_7] : memref<256x256xbf16, #tpu.memory_space<vmem>>, vector<256x256xbf16>
    %cst_8 = arith.constant dense<0.000000e+00> : vector<64x256xf32>
    %11 = tpu.matmul %9, %10, %cst_8 {dimension_numbers = #tpu.dot_dimension_numbers<[1], [0], [0], [1], [0, 0, 1, 1], [], []>} : vector<64x256xbf16>, vector<256x256xbf16>, vector<64x256xf32> -> vector<64x256xf32>
    %c0_9 = arith.constant 0 : index
    %c0_10 = arith.constant 0 : index
    %12 = vector.load %arg5[%c0_9, %c0_10] : memref<1x256xf32, #tpu.memory_space<vmem>>, vector<1x256xf32>
    %13 = vector.broadcast %12 : vector<1x256xf32> to vector<64x256xf32>
    %14 = arith.addf %11, %13 : vector<64x256xf32>
    %cst_11 = arith.constant 0.000000e+00 : f32
    %15 = vector.broadcast %cst_11 : f32 to vector<64x256xf32>
    %16 = arith.maximumf %14, %15 : vector<64x256xf32>
    %17 = arith.truncf %16 : vector<64x256xf32> to vector<64x256xbf16>
    %c0_12 = arith.constant 0 : index
    %c0_13 = arith.constant 0 : index
    %18 = vector.load %arg6[%c0_12, %c0_13] : memref<256x256xbf16, #tpu.memory_space<vmem>>, vector<256x256xbf16>
    %cst_14 = arith.constant dense<0.000000e+00> : vector<64x256xf32>
    %19 = tpu.matmul %17, %18, %cst_14 {dimension_numbers = #tpu.dot_dimension_numbers<[1], [0], [0], [1], [0, 0, 1, 1], [], []>} : vector<64x256xbf16>, vector<256x256xbf16>, vector<64x256xf32> -> vector<64x256xf32>
    %c0_15 = arith.constant 0 : index
    %c0_16 = arith.constant 0 : index
    %20 = vector.load %arg7[%c0_15, %c0_16] : memref<1x256xf32, #tpu.memory_space<vmem>>, vector<1x256xf32>
    %21 = vector.broadcast %20 : vector<1x256xf32> to vector<64x256xf32>
    %22 = arith.addf %19, %21 : vector<64x256xf32>
    %cst_17 = arith.constant 0.000000e+00 : f32
    %23 = vector.broadcast %cst_17 : f32 to vector<64x256xf32>
    %24 = arith.maximumf %22, %23 : vector<64x256xf32>
    %25 = arith.truncf %24 : vector<64x256xf32> to vector<64x256xbf16>
    %c0_18 = arith.constant 0 : index
    %c0_19 = arith.constant 0 : index
    %26 = vector.load %arg8[%c0_18, %c0_19] : memref<256x256xbf16, #tpu.memory_space<vmem>>, vector<256x256xbf16>
    %cst_20 = arith.constant dense<0.000000e+00> : vector<64x256xf32>
    %27 = tpu.matmul %25, %26, %cst_20 {dimension_numbers = #tpu.dot_dimension_numbers<[1], [0], [0], [1], [0, 0, 1, 1], [], []>} : vector<64x256xbf16>, vector<256x256xbf16>, vector<64x256xf32> -> vector<64x256xf32>
    %c0_21 = arith.constant 0 : index
    %c0_22 = arith.constant 0 : index
    %28 = vector.load %arg9[%c0_21, %c0_22] : memref<1x256xf32, #tpu.memory_space<vmem>>, vector<1x256xf32>
    %29 = vector.broadcast %28 : vector<1x256xf32> to vector<64x256xf32>
    %30 = arith.addf %27, %29 : vector<64x256xf32>
    %cst_23 = arith.constant 0.000000e+00 : f32
    %31 = vector.broadcast %cst_23 : f32 to vector<64x256xf32>
    %32 = arith.maximumf %30, %31 : vector<64x256xf32>
    %33 = arith.truncf %32 : vector<64x256xf32> to vector<64x256xbf16>
    %c0_24 = arith.constant 0 : index
    %c0_25 = arith.constant 0 : index
    %34 = vector.load %arg10[%c0_24, %c0_25] : memref<256x128xbf16, #tpu.memory_space<vmem>>, vector<256x128xbf16>
    %cst_26 = arith.constant dense<0.000000e+00> : vector<64x128xf32>
    %35 = tpu.matmul %33, %34, %cst_26 {dimension_numbers = #tpu.dot_dimension_numbers<[1], [0], [0], [1], [0, 0, 1, 1], [], []>} : vector<64x256xbf16>, vector<256x128xbf16>, vector<64x128xf32> -> vector<64x128xf32>
    %c0_27 = arith.constant 0 : index
    %c0_28 = arith.constant 0 : index
    %36 = vector.load %arg11[%c0_27, %c0_28] : memref<1x128xf32, #tpu.memory_space<vmem>>, vector<1x128xf32>
    %37 = vector.broadcast %36 : vector<1x128xf32> to vector<64x128xf32>
    %38 = arith.addf %35, %37 : vector<64x128xf32>
    %c0_29 = arith.constant 0 : index
    %c0_30 = arith.constant 0 : index
    %39 = vector.load %arg12[%c0_29, %c0_30] : memref<64x128xf32, #tpu.memory_space<vmem>>, vector<64x128xf32>
    tpu.vector_store %arg12[%c0_29, %c0_30], %38 {strides = array<i32>} : memref<64x128xf32, #tpu.memory_space<vmem>>, vector<64x128xf32>,
    return
  }
  func.func @transform_0(%arg0: i32) -> (i32, i32) {
    %c0_i32 = arith.constant 0 : i32
    %c0_i32_0 = arith.constant 0 : i32
    return %arg0, %c0_i32 : i32, i32
  }
  func.func @transform_1(%arg0: i32) -> (i32, i32) {
    %c0_i32 = arith.constant 0 : i32
    %c0_i32_0 = arith.constant 0 : i32
    %c0_i32_1 = arith.constant 0 : i32
    return %c0_i32, %c0_i32_0 : i32, i32
  }
  func.func @transform_2(%arg0: i32) -> (i32, i32) {
    %c0_i32 = arith.constant 0 : i32
    %c0_i32_0 = arith.constant 0 : i32
    %c0_i32_1 = arith.constant 0 : i32
    return %c0_i32, %c0_i32_0 : i32, i32
  }
  func.func @transform_3(%arg0: i32) -> (i32, i32) {
    %c0_i32 = arith.constant 0 : i32
    %c0_i32_0 = arith.constant 0 : i32
    %c0_i32_1 = arith.constant 0 : i32
    return %c0_i32, %c0_i32_0 : i32, i32
  }
  func.func @transform_4(%arg0: i32) -> (i32, i32) {
    %c0_i32 = arith.constant 0 : i32
    %c0_i32_0 = arith.constant 0 : i32
    %c0_i32_1 = arith.constant 0 : i32
    return %c0_i32, %c0_i32_0 : i32, i32
  }
  func.func @transform_5(%arg0: i32) -> (i32, i32) {
    %c0_i32 = arith.constant 0 : i32
    %c0_i32_0 = arith.constant 0 : i32
    %c0_i32_1 = arith.constant 0 : i32
    return %c0_i32, %c0_i32_0 : i32, i32
  }
  func.func @transform_6(%arg0: i32) -> (i32, i32) {
    %c0_i32 = arith.constant 0 : i32
    %c0_i32_0 = arith.constant 0 : i32
    %c0_i32_1 = arith.constant 0 : i32
    return %c0_i32, %c0_i32_0 : i32, i32
  }
  func.func @transform_7(%arg0: i32) -> (i32, i32) {
    %c0_i32 = arith.constant 0 : i32
    %c0_i32_0 = arith.constant 0 : i32
    %c0_i32_1 = arith.constant 0 : i32
    return %c0_i32, %c0_i32_0 : i32, i32
  }
  func.func @transform_8(%arg0: i32) -> (i32, i32) {
    %c0_i32 = arith.constant 0 : i32
    %c0_i32_0 = arith.constant 0 : i32
    %c0_i32_1 = arith.constant 0 : i32
    return %c0_i32, %c0_i32_0 : i32, i32
  }
  func.func @transform_9(%arg0: i32) -> (i32, i32) {
    %c0_i32 = arith.constant 0 : i32
    %c0_i32_0 = arith.constant 0 : i32
    %c0_i32_1 = arith.constant 0 : i32
    return %c0_i32, %c0_i32_0 : i32, i32
  }
  func.func @transform_10(%arg0: i32) -> (i32, i32) {
    %c0_i32 = arith.constant 0 : i32
    %c0_i32_0 = arith.constant 0 : i32
    %c0_i32_1 = arith.constant 0 : i32
    return %c0_i32, %c0_i32_0 : i32, i32
  }
  func.func @transform_11(%arg0: i32) -> (i32, i32) {
    %c0_i32 = arith.constant 0 : i32
    %c0_i32_0 = arith.constant 0 : i32
    return %arg0, %c0_i32 : i32, i32
  }
}

</mosaic_0001>

<llo_original>
// kernel: mlp_refiner_forward.1
$region0: #{mlp_refiner_forward.1}
  #allocation0 [shape = 'u32[]', space=smem, size = 0x4, offset = 0x4, fixed_abs, tag = 'smem constant byte address 0x4 - core index']
  #allocation1 [shape = 'u32[144,128]{1,0:T(1,128)}', space=vmem, size = 0x12000, scoped, tag = 'internal scratch']
  %s0 = inlined_call_operand.vmem [shape: f32[128,64], index: 0, kind: input, shape index: {}]
  %s1 = inlined_call_operand.hbm [shape: bf16[64,256], index: 1, kind: input, shape index: {}]
  %s2 = inlined_call_operand.vmem [shape: f32[1,256], index: 2, kind: input, shape index: {}]
  %s3 = inlined_call_operand.vmem [shape: bf16[256,256], index: 3, kind: input, shape index: {}]
  %s4 = inlined_call_operand.vmem [shape: f32[1,256], index: 4, kind: input, shape index: {}]
  %s5 = inlined_call_operand.hbm [shape: bf16[256,256], index: 5, kind: input, shape index: {}]
  %s6 = inlined_call_operand.vmem [shape: f32[1,256], index: 6, kind: input, shape index: {}]
  %s7 = inlined_call_operand.hbm [shape: bf16[256,256], index: 7, kind: input, shape index: {}]
  %s8 = inlined_call_operand.vmem [shape: f32[1,256], index: 8, kind: input, shape index: {}]
  %s9 = inlined_call_operand.vmem [shape: bf16[256,128], index: 9, kind: input, shape index: {}]
  %s10 = inlined_call_operand.vmem [shape: f32[1,128], index: 10, kind: input, shape index: {}]
  %s11 = inlined_call_operand.vmem [shape: f32[128,128], index: 11, kind: output, shape index: {}]
  %s12 = sld [smem:[#allocation0]]
  $region89: #{mlp_refiner_forward.1} parent=0
    _
  %s14 = ssub.s32 1, %s12
  %s15 = scalar_select 0, %s14, %s12
  $region1: #{mlp_refiner_forward.1} parent=0
    #allocation2 [shape = 'u8[32768]{0}', space=vmem, size = 0x8000, scoped, tag = 'input window, operand 1, single buffered']
    #allocation3 [shape = 's32[2]{0}', space=sflag, size = 0x8, scoped, tag = 'scoped memory for mlp_refiner_forward.1']
    #allocation4 [shape = 'u8[131072]{0}', space=vmem, size = 0x20000, scoped, tag = 'input window, operand 5, single buffered']
    #allocation5 [shape = 's32[1]{0}', space=sflag, size = 0x4, scoped, tag = 'scoped memory for mlp_refiner_forward.1']
    #allocation6 [shape = 'u8[131072]{0}', space=vmem, size = 0x20000, scoped, tag = 'input window, operand 7, single buffered']
    %16 = vsyncpa [#allocation3], 0
    %17 = vsyncpa [#allocation5], 0
    loop: start=0, step=1, limit=4
    $region2: #{mlp_refiner_forward.1} parent=1 // loop_pre_header
      _
    $region3: #{mlp_refiner_forward.1} parent=1 // loop_header
      %s19 = sphi 0, %s23
      %p20 = scmp.ge.s32.totalorder %s19, 4
      %s29 = sphi 0, %s31
      %s32 = sphi 0, %s29
      %s33 = sphi 0, %s32
      %s49 = sphi 0, %s33
      %s53 = sphi 0, %s53
      %s55 = sphi 0, %s53
      %s56 = sphi 0, %s55
      %s70 = sphi 0, %s56
      %s74 = sphi 0, %s74
      %s76 = sphi 0, %s74
      %s77 = sphi 0, %s76
      %s91 = sphi 0, %s77
      %s95 = sphi 0, %s95
      %s97 = sphi 0, %s95
      %s98 = sphi 0, %s97
      %s112 = sphi 0, %s98
      %s116 = sphi 0, %s116
      %s118 = sphi 0, %s116
      %s119 = sphi 0, %s118
      %s133 = sphi 0, %s119
      %s137 = sphi 0, %s137
      %s139 = sphi 0, %s137
      %s140 = sphi 0, %s139
      %s154 = sphi 0, %s140
      %s158 = sphi 0, %s158
      %s160 = sphi 0, %s158
      %s161 = sphi 0, %s160
      %s175 = sphi 0, %s161
      %s179 = sphi 0, %s179
      %s181 = sphi 0, %s179
      %s182 = sphi 0, %s181
      %s196 = sphi 0, %s182
      %s200 = sphi 0, %s200
      %s202 = sphi 0, %s200
      %s203 = sphi 0, %s202
      %s217 = sphi 0, %s203
      %s221 = sphi 0, %s221
      %s223 = sphi 0, %s221
      %s224 = sphi 0, %s223
      %s238 = sphi 0, %s224
      %s242 = sphi 0, %s242
      %s244 = sphi 0, %s242
      %s245 = sphi 0, %s244
      %s259 = sphi 0, %s245
      %s265 = sphi 0, %s267
      %s268 = sphi 0, %s265
      %s269 = sphi 0, %s268
      %s285 = sphi 0, %s269
    $region4: #{mlp_refiner_forward.1} parent=1 // loop_header_branch
      %22 = sbr.rel (%p20) target = $region8
    $region5: #{mlp_refiner_forward.1} parent=1 // loop_body
      %s24 = ssub.s32 %s19, 1
      %s25 = ssub.s32 %s19, 2
      %s26 = sadd.s32 %s19, 1
      %s27 = ssub.s32 %s19, %s26
      %p28 = scmp.eq.s32.totalorder %s27, 0
      %s30 = sadd.s32 %s29, 1
      %s31 = scalar_select %p28, %s29, %s30
      %p34 = pneg %p28
      %p35 = scmp.eq.s32.totalorder %s19, 1
      %p36 = por %p34, %p35
      %p37 = scmp.ne.s32.totalorder %s29, %s32
      %p38 = scmp.eq.s32.totalorder %s19, 0
      %p39 = por %p37, %p38
      %p40 = scmp.ne.s32.totalorder %s29, %s32
      %p41 = scmp.eq.s32.totalorder %s24, 1
      %p42 = por %p40, %p41
      %p43 = scmp.ne.s32.totalorder %s32, %s33
      %p44 = scmp.eq.s32.totalorder %s24, 0
      %p45 = por %p43, %p44
      %p46 = scmp.ne.s32.totalorder %s32, %s33
      %p47 = scmp.eq.s32.totalorder %s25, 1
      %p48 = por %p46, %p47
      %p50 = scmp.ne.s32.totalorder %s33, %s49
      %p51 = scmp.eq.s32.totalorder %s25, 0
      %p52 = por %p50, %p51
      %s54 = sadd.s32 %s53, 1
      %p57 = scmp.eq.s32.totalorder %s19, 1
      %p58 = scmp.ne.s32.totalorder %s53, %s55
      %p59 = scmp.eq.s32.totalorder %s19, 0
      %p60 = por %p58, %p59
      %p61 = scmp.ne.s32.totalorder %s53, %s55
      %p62 = scmp.eq.s32.totalorder %s24, 1
      %p63 = por %p61, %p62
      %p64 = scmp.ne.s32.totalorder %s55, %s56
      %p65 = scmp.eq.s32.totalorder %s24, 0
      %p66 = por %p64, %p65
      %p67 = scmp.ne.s32.totalorder %s55, %s56
      %p68 = scmp.eq.s32.totalorder %s25, 1
      %p69 = por %p67, %p68
      %p71 = scmp.ne.s32.totalorder %s56, %s70
      %p72 = scmp.eq.s32.totalorder %s25, 0
      %p73 = por %p71, %p72
      %s75 = sadd.s32 %s74, 1
      %p78 = scmp.eq.s32.totalorder %s19, 1
      %p79 = scmp.ne.s32.totalorder %s74, %s76
      %p80 = scmp.eq.s32.totalorder %s19, 0
      %p81 = por %p79, %p80
      %p82 = scmp.ne.s32.totalorder %s74, %s76
      %p83 = scmp.eq.s32.totalorder %s24, 1
      %p84 = por %p82, %p83
      %p85 = scmp.ne.s32.totalorder %s76, %s77
      %p86 = scmp.eq.s32.totalorder %s24, 0
      %p87 = por %p85, %p86
      %p88 = scmp.ne.s32.totalorder %s76, %s77
      %p89 = scmp.eq.s32.totalorder %s25, 1
      %p90 = por %p88, %p89
      %p92 = scmp.ne.s32.totalorder %s77, %s91
      %p93 = scmp.eq.s32.totalorder %s25, 0
      %p94 = por %p92, %p93
      %s96 = sadd.s32 %s95, 1
      %p99 = scmp.eq.s32.totalorder %s19, 1
      %p100 = scmp.ne.s32.totalorder %s95, %s97
      %p101 = scmp.eq.s32.totalorder %s19, 0
      %p102 = por %p100, %p101
      %p103 = scmp.ne.s32.totalorder %s95, %s97
      %p104 = scmp.eq.s32.totalorder %s24, 1
      %p105 = por %p103, %p104
      %p106 = scmp.ne.s32.totalorder %s97, %s98
      %p107 = scmp.eq.s32.totalorder %s24, 0
      %p108 = por %p106, %p107
      %p109 = scmp.ne.s32.totalorder %s97, %s98
      %p110 = scmp.eq.s32.totalorder %s25, 1
      %p111 = por %p109, %p110
      %p113 = scmp.ne.s32.totalorder %s98, %s112
      %p114 = scmp.eq.s32.totalorder %s25, 0
      %p115 = por %p113, %p114
      %s117 = sadd.s32 %s116, 1
      %p120 = scmp.eq.s32.totalorder %s19, 1
      %p121 = scmp.ne.s32.totalorder %s116, %s118
      %p122 = scmp.eq.s32.totalorder %s19, 0
      %p123 = por %p121, %p122
      %p124 = scmp.ne.s32.totalorder %s116, %s118
      %p125 = scmp.eq.s32.totalorder %s24, 1
      %p126 = por %p124, %p125
      %p127 = scmp.ne.s32.totalorder %s118, %s119
      %p128 = scmp.eq.s32.totalorder %s24, 0
      %p129 = por %p127, %p128
      %p130 = scmp.ne.s32.totalorder %s118, %s119
      %p131 = scmp.eq.s32.totalorder %s25, 1
      %p132 = por %p130, %p131
      %p134 = scmp.ne.s32.totalorder %s119, %s133
      %p135 = scmp.eq.s32.totalorder %s25, 0
      %p136 = por %p134, %p135
      %s138 = sadd.s32 %s137, 1
      %p141 = scmp.eq.s32.totalorder %s19, 1
      %p142 = scmp.ne.s32.totalorder %s137, %s139
      %p143 = scmp.eq.s32.totalorder %s19, 0
      %p144 = por %p142, %p143
      %p145 = scmp.ne.s32.totalorder %s137, %s139
      %p146 = scmp.eq.s32.totalorder %s24, 1
      %p147 = por %p145, %p146
      %p148 = scmp.ne.s32.totalorder %s139, %s140
      %p149 = scmp.eq.s32.totalorder %s24, 0
      %p150 = por %p148, %p149
      %p151 = scmp.ne.s32.totalorder %s139, %s140
      %p152 = scmp.eq.s32.totalorder %s25, 1
      %p153 = por %p151, %p152
      %p155 = scmp.ne.s32.totalorder %s140, %s154
      %p156 = scmp.eq.s32.totalorder %s25, 0
      %p157 = por %p155, %p156
      %s159 = sadd.s32 %s158, 1
      %p162 = scmp.eq.s32.totalorder %s19, 1
      %p163 = scmp.ne.s32.totalorder %s158, %s160
      %p164 = scmp.eq.s32.totalorder %s19, 0
      %p165 = por %p163, %p164
      %p166 = scmp.ne.s32.totalorder %s158, %s160
      %p167 = scmp.eq.s32.totalorder %s24, 1
      %p168 = por %p166, %p167
      %p169 = scmp.ne.s32.totalorder %s160, %s161
      %p170 = scmp.eq.s32.totalorder %s24, 0
      %p171 = por %p169, %p170
      %p172 = scmp.ne.s32.totalorder %s160, %s161
      %p173 = scmp.eq.s32.totalorder %s25, 1
      %p174 = por %p172, %p173
      %p176 = scmp.ne.s32.totalorder %s161, %s175
      %p177 = scmp.eq.s32.totalorder %s25, 0
      %p178 = por %p176, %p177
      %s180 = sadd.s32 %s179, 1
      %p183 = scmp.eq.s32.totalorder %s19, 1
      %p184 = scmp.ne.s32.totalorder %s179, %s181
      %p185 = scmp.eq.s32.totalorder %s19, 0
      %p186 = por %p184, %p185
      %p187 = scmp.ne.s32.totalorder %s179, %s181
      %p188 = scmp.eq.s32.totalorder %s24, 1
      %p189 = por %p187, %p188
      %p190 = scmp.ne.s32.totalorder %s181, %s182
      %p191 = scmp.eq.s32.totalorder %s24, 0
      %p192 = por %p190, %p191
      %p193 = scmp.ne.s32.totalorder %s181, %s182
      %p194 = scmp.eq.s32.totalorder %s25, 1
      %p195 = por %p193, %p194
      %p197 = scmp.ne.s32.totalorder %s182, %s196
      %p198 = scmp.eq.s32.totalorder %s25, 0
      %p199 = por %p197, %p198
      %s201 = sadd.s32 %s200, 1
      %p204 = scmp.eq.s32.totalorder %s19, 1
      %p205 = scmp.ne.s32.totalorder %s200, %s202
      %p206 = scmp.eq.s32.totalorder %s19, 0
      %p207 = por %p205, %p206
      %p208 = scmp.ne.s32.totalorder %s200, %s202
      %p209 = scmp.eq.s32.totalorder %s24, 1
      %p210 = por %p208, %p209
      %p211 = scmp.ne.s32.totalorder %s202, %s203
      %p212 = scmp.eq.s32.totalorder %s24, 0
      %p213 = por %p211, %p212
      %p214 = scmp.ne.s32.totalorder %s202, %s203
      %p215 = scmp.eq.s32.totalorder %s25, 1
      %p216 = por %p214, %p215
      %p218 = scmp.ne.s32.totalorder %s203, %s217
      %p219 = scmp.eq.s32.totalorder %s25, 0
      %p220 = por %p218, %p219
      %s222 = sadd.s32 %s221, 1
      %p225 = scmp.eq.s32.totalorder %s19, 1
      %p226 = scmp.ne.s32.totalorder %s221, %s223
      %p227 = scmp.eq.s32.totalorder %s19, 0
      %p228 = por %p226, %p227
      %p229 = scmp.ne.s32.totalorder %s221, %s223
      %p230 = scmp.eq.s32.totalorder %s24, 1
      %p231 = por %p229, %p230
      %p232 = scmp.ne.s32.totalorder %s223, %s224
      %p233 = scmp.eq.s32.totalorder %s24, 0
      %p234 = por %p232, %p233
      %p235 = scmp.ne.s32.totalorder %s223, %s224
      %p236 = scmp.eq.s32.totalorder %s25, 1
      %p237 = por %p235, %p236
      %p239 = scmp.ne.s32.totalorder %s224, %s238
      %p240 = scmp.eq.s32.totalorder %s25, 0
      %p241 = por %p239, %p240
      %s243 = sadd.s32 %s242, 1
      %p246 = scmp.eq.s32.totalorder %s19, 1
      %p247 = scmp.ne.s32.totalorder %s242, %s244
      %p248 = scmp.eq.s32.totalorder %s19, 0
      %p249 = por %p247, %p248
      %p250 = scmp.ne.s32.totalorder %s242, %s244
      %p251 = scmp.eq.s32.totalorder %s24, 1
      %p252 = por %p250, %p251
      %p253 = scmp.ne.s32.totalorder %s244, %s245
      %p254 = scmp.eq.s32.totalorder %s24, 0
      %p255 = por %p253, %p254
      %p256 = scmp.ne.s32.totalorder %s244, %s245
      %p257 = scmp.eq.s32.totalorder %s25, 1
      %p258 = por %p256, %p257
      %p260 = scmp.ne.s32.totalorder %s245, %s259
      %p261 = scmp.eq.s32.totalorder %s25, 0
      %p262 = por %p260, %p261
      %s263 = ssub.s32 %s19, %s26
      %p264 = scmp.eq.s32.totalorder %s263, 0
      %s266 = sadd.s32 %s265, 1
      %s267 = scalar_select %p264, %s265, %s266
      %p270 = pneg %p264
      %p271 = scmp.eq.s32.totalorder %s19, 1
      %p272 = por %p270, %p271
      %p273 = scmp.ne.s32.totalorder %s265, %s268
      %p274 = scmp.eq.s32.totalorder %s19, 0
      %p275 = por %p273, %p274
      %p276 = scmp.ne.s32.totalorder %s265, %s268
      %p277 = scmp.eq.s32.totalorder %s24, 1
      %p278 = por %p276, %p277
      %p279 = scmp.ne.s32.totalorder %s268, %s269
      %p280 = scmp.eq.s32.totalorder %s24, 0
      %p281 = por %p279, %p280
      %p282 = scmp.ne.s32.totalorder %s268, %s269
      %p283 = scmp.eq.s32.totalorder %s25, 1
      %p284 = por %p282, %p283
      %p286 = scmp.ne.s32.totalorder %s269, %s285
      %p287 = scmp.eq.s32.totalorder %s25, 0
      %p288 = por %p286, %p287
      %p289 = scmp.le.s32.totalorder 1, %s19
      %p290 = scmp.lt.s32.totalorder %s19, 3
      %p291 = pnand %p289, %p290
      %p292 = pneg %p291
      // Predicated region
      $region9: #{mlp_refiner_forward.1} parent=5 // pred_check
        _
      $region10: #{mlp_refiner_forward.1} parent=5 // pred_check_branch
        %294 = sbr.rel (%p291) target = $region12
      $region11: #{mlp_refiner_forward.1} parent=5 // pred_region
        %s295 = ssub.s32 %s19, 1
        // Predicated region
        $region13: #{mlp_refiner_forward.1} parent=11 // pred_check
          %p296 = pneg %p66
        $region14: #{mlp_refiner_forward.1} parent=11 // pred_check_branch
          %298 = sbr.rel (%p296) target = $region16
        $region15: #{mlp_refiner_forward.1} parent=11 // pred_region
          %s300 = ssub.s32 1024, 1024
          %301 = vsyncadd [#allocation3], %s300
          %s302 = sshll.u32 [#allocation2], 4
          %s303 = int_to_ptr.vmem [resolvable:$true] %s302
          %308 = dma.hbm_to_vmem [thread:$0]  %s1, 1024, %s303, [#allocation3], 128, 128, 8
        $region16: #{mlp_refiner_forward.1} parent=11 // pred_fallthru
          _
        // Predicated region
        $region17: #{mlp_refiner_forward.1} parent=11 // pred_check
          %p309 = pneg %p87
        $region18: #{mlp_refiner_forward.1} parent=11 // pred_check_branch
          %311 = sbr.rel (%p309) target = $region20
        $region19: #{mlp_refiner_forward.1} parent=11 // pred_region
          _
        $region20: #{mlp_refiner_forward.1} parent=11 // pred_fallthru
          _
        // Predicated region
        $region21: #{mlp_refiner_forward.1} parent=11 // pred_check
          %p312 = pneg %p108
        $region22: #{mlp_refiner_forward.1} parent=11 // pred_check_branch
          %314 = sbr.rel (%p312) target = $region24
        $region23: #{mlp_refiner_forward.1} parent=11 // pred_region
          _
        $region24: #{mlp_refiner_forward.1} parent=11 // pred_fallthru
          _
        // Predicated region
        $region25: #{mlp_refiner_forward.1} parent=11 // pred_check
          %p315 = pneg %p129
        $region26: #{mlp_refiner_forward.1} parent=11 // pred_check_branch
          %317 = sbr.rel (%p315) target = $region28
        $region27: #{mlp_refiner_forward.1} parent=11 // pred_region
          _
        $region28: #{mlp_refiner_forward.1} parent=11 // pred_fallthru
          _
        // Predicated region
        $region29: #{mlp_refiner_forward.1} parent=11 // pred_check
          %p318 = pneg %p150
        $region30: #{mlp_refiner_forward.1} parent=11 // pred_check_branch
          %320 = sbr.rel (%p318) target = $region32
        $region31: #{mlp_refiner_forward.1} parent=11 // pred_region
          %s322 = ssub.s32 4096, 4096
          %323 = vsyncadd [#allocation5], %s322
          %s324 = sshll.u32 [#allocation4], 4
          %s325 = int_to_ptr.vmem [resolvable:$true] %s324
          %330 = dma.hbm_to_vmem [thread:$0]  %s5, 4096, %s325, [#allocation5], 128, 128, 8
        $region32: #{mlp_refiner_forward.1} parent=11 // pred_fallthru
          _
        // Predicated region
        $region33: #{mlp_refiner_forward.1} parent=11 // pred_check
          %p331 = pneg %p171
        $region34: #{mlp_refiner_forward.1} parent=11 // pred_check_branch
          %333 = sbr.rel (%p331) target = $region36
        $region35: #{mlp_refiner_forward.1} parent=11 // pred_region
          _
        $region36: #{mlp_refiner_forward.1} parent=11 // pred_fallthru
          _
        // Predicated region
        $region37: #{mlp_refiner_forward.1} parent=11 // pred_check
          %p334 = pneg %p192
        $region38: #{mlp_refiner_forward.1} parent=11 // pred_check_branch
          %336 = sbr.rel (%p334) target = $region40
        $region39: #{mlp_refiner_forward.1} parent=11 // pred_region
          %s338 = ssub.s32 4096, 4096
          %339 = vsyncadd [#allocation5], %s338
          %s340 = sshll.u32 [#allocation6], 4
          %s341 = int_to_ptr.vmem [resolvable:$true] %s340
          %346 = dma.hbm_to_vmem [thread:$0]  %s7, 4096, %s341, [#allocation5], 128, 128, 8
        $region40: #{mlp_refiner_forward.1} parent=11 // pred_fallthru
          _
        // Predicated region
        $region41: #{mlp_refiner_forward.1} parent=11 // pred_check
          %p347 = pneg %p213
        $region42: #{mlp_refiner_forward.1} parent=11 // pred_check_branch
          %349 = sbr.rel (%p347) target = $region44
        $region43: #{mlp_refiner_forward.1} parent=11 // pred_region
          _
        $region44: #{mlp_refiner_forward.1} parent=11 // pred_fallthru
          _
        // Predicated region
        $region45: #{mlp_refiner_forward.1} parent=11 // pred_check
          %p350 = pneg %p234
        $region46: #{mlp_refiner_forward.1} parent=11 // pred_check_branch
          %352 = sbr.rel (%p350) target = $region48
        $region47: #{mlp_refiner_forward.1} parent=11 // pred_region
          _
        $region48: #{mlp_refiner_forward.1} parent=11 // pred_fallthru
          _
        // Predicated region
        $region49: #{mlp_refiner_forward.1} parent=11 // pred_check
          %p353 = pneg %p255
        $region50: #{mlp_refiner_forward.1} parent=11 // pred_check_branch
          %355 = sbr.rel (%p353) target = $region52
        $region51: #{mlp_refiner_forward.1} parent=11 // pred_region
          _
        $region52: #{mlp_refiner_forward.1} parent=11 // pred_fallthru
          _
      $region12: #{mlp_refiner_forward.1} parent=5 // pred_fallthru
        _
      %p356 = scmp.lt.s32.totalorder %s19, 2
      // Predicated region
      $region53: #{mlp_refiner_forward.1} parent=5 // pred_check
        %p357 = pneg %p356
      $region54: #{mlp_refiner_forward.1} parent=5 // pred_check_branch
        %359 = sbr.rel (%p357) target = $region56
      $region55: #{mlp_refiner_forward.1} parent=5 // pred_region
        // Predicated region
        $region57: #{mlp_refiner_forward.1} parent=55 // pred_check
          %p360 = pneg %p39
        $region58: #{mlp_refiner_forward.1} parent=55 // pred_check_branch
          %362 = sbr.rel (%p360) target = $region60
        $region59: #{mlp_refiner_forward.1} parent=55 // pred_region
          %s363 = smul.u32 8, %s19
          %p364 = scmp.lt.s32.totalorder %s363, 15
          %s365 = scalar_select %p364, %s363, 15
          %s366 = smul.addr %s365, 8
          %s367 = scalar_lea.vmem %s0, %s366
          %s368 = smul.u32 8, %s19
        $region60: #{mlp_refiner_forward.1} parent=55 // pred_fallthru
          _
      $region56: #{mlp_refiner_forward.1} parent=5 // pred_fallthru
        _
      %p369 = scmp.le.s32.totalorder 1, %s19
      %p370 = scmp.lt.s32.totalorder %s19, 3
      %p371 = pnand %p369, %p370
      %p372 = pneg %p371
      // Predicated region
      $region61: #{mlp_refiner_forward.1} parent=5 // pred_check
        _
      $region62: #{mlp_refiner_forward.1} parent=5 // pred_check_branch
        %374 = sbr.rel (%p371) target = $region64
      $region63: #{mlp_refiner_forward.1} parent=5 // pred_region
        %s375 = ssub.s32 %s19, 1
        // Predicated region
        $region65: #{mlp_refiner_forward.1} parent=63 // pred_check
          %p376 = pneg %p66
        $region66: #{mlp_refiner_forward.1} parent=63 // pred_check_branch
          %378 = sbr.rel (%p376) target = $region68
        $region67: #{mlp_refiner_forward.1} parent=63 // pred_region
          %379 = dma.done [#allocation3], 1024
        $region68: #{mlp_refiner_forward.1} parent=63 // pred_fallthru
          _
        // Predicated region
        $region69: #{mlp_refiner_forward.1} parent=63 // pred_check
          %p380 = pneg %p150
        $region70: #{mlp_refiner_forward.1} parent=63 // pred_check_branch
          %382 = sbr.rel (%p380) target = $region72
        $region71: #{mlp_refiner_forward.1} parent=63 // pred_region
          %383 = dma.done [#allocation5], 4096
        $region72: #{mlp_refiner_forward.1} parent=63 // pred_fallthru
          _
        // Predicated region
        $region73: #{mlp_refiner_forward.1} parent=63 // pred_check
          %p384 = pneg %p192
        $region74: #{mlp_refiner_forward.1} parent=63 // pred_check_branch
          %386 = sbr.rel (%p384) target = $region76
        $region75: #{mlp_refiner_forward.1} parent=63 // pred_region
          %387 = dma.done [#allocation5], 4096
        $region76: #{mlp_refiner_forward.1} parent=63 // pred_fallthru
          _
        %s388 = smul.u32 8, %s24
        %p389 = scmp.lt.s32.totalorder %s388, 15
        %s390 = scalar_select %p389, %s388, 15
        %s391 = smul.addr %s390, 8
        %s392 = scalar_lea.vmem %s0, %s391
        %p393 = pneg %p45
        %p394 = pneg %p42
        %p395 = pneg %p66
        %p396 = pneg %p63
        %p397 = pneg %p87
        %p398 = pneg %p84
        %p399 = pneg %p108
        %p400 = pneg %p105
        %p401 = pneg %p129
        %p402 = pneg %p126
        %p403 = pneg %p150
        %p404 = pneg %p147
        %p405 = pneg %p171
        %p406 = pneg %p168
        %p407 = pneg %p192
        %p408 = pneg %p189
        %p409 = pneg %p213
        %p410 = pneg %p210
        %p411 = pneg %p234
        %p412 = pneg %p231
        %p413 = pneg %p255
        %p414 = pneg %p252
        %p415 = pneg %p281
        %p416 = pneg %p278
        %s417 = smul.u32 8, %s24
        %p418 = scmp.lt.s32.totalorder %s417, 15
        %s419 = scalar_select %p418, %s417, 15
        %s420 = smul.addr %s419, 8
        %s421 = scalar_lea.vmem %s11, %s420
        %s422 = smul.u32 8, %s24
        %p423 = scmp.lt.s32.totalorder %s422, 15
        %s424 = scalar_select %p423, %s422, 15
        %s425 = smul.addr %s424, 8
        %s426 = scalar_lea.vmem %s0, %s425
        %s427 = smul.u32 8, %s24
        %s428 = smul.u32 8, %s24
        %p429 = scmp.lt.s32.totalorder %s428, 15
        %s430 = scalar_select %p429, %s428, 15
        %s431 = smul.addr %s430, 8
        %s432 = scalar_lea.vmem %s11, %s431
        %s433 = smul.u32 8, %s24
        %v435 = vld [vmem:[%s426] sm:$0xff]
        %v436 = vld [vmem:[%s426 + $0x8] sm:$0xff]
        %v437 = vld [vmem:[%s426 + $0x10] sm:$0xff]
        %v438 = vld [vmem:[%s426 + $0x18] sm:$0xff]
        %v439 = vld [vmem:[%s426 + $0x20] sm:$0xff]
        %v440 = vld [vmem:[%s426 + $0x28] sm:$0xff]
        %v441 = vld [vmem:[%s426 + $0x30] sm:$0xff]
        %v442 = vld [vmem:[%s426 + $0x38] sm:$0xff]
        %v443 = vpack.c.bf16 %v436, %v435
        %v444 = vpack.c.bf16 %v438, %v437
        %v445 = vpack.c.bf16 %v440, %v439
        %v446 = vpack.c.bf16 %v442, %v441
        %v447 = vld [vmem:[#allocation2] sm:$0xff]
        %v448 = vld [vmem:[#allocation2 + $0x8] sm:$0xff]
        %v449 = vld [vmem:[#allocation2 + $0x10] sm:$0xff]
        %v450 = vld [vmem:[#allocation2 + $0x18] sm:$0xff]
        %v451 = vld [vmem:[#allocation2 + $0x20] sm:$0xff]
        %v452 = vld [vmem:[#allocation2 + $0x28] sm:$0xff]
        %v453 = vld [vmem:[#allocation2 + $0x30] sm:$0xff]
        %v454 = vld [vmem:[#allocation2 + $0x38] sm:$0xff]
        %v455 = vld [vmem:[%s2] sm:$0x3]
        %v457 = vlaneseq
        %v458 = vshrl.u32 %v457, 7
        %v459 = vsub.s32 0, %v458
        %v460 = vrot.slane %v455, %v459
        %v461 = vlaneseq
        %v462 = vshrl.u32 %v461, 7
        %v463 = vsub.s32 1, %v462
        %v464 = vrot.slane %v455, %v463
        %v475 = vunpack.c.l.b16 %v447
        %v476 = vunpack.c.h.b16 %v447
        %v477 = vunpack.c.l.b16 %v448
        %v478 = vunpack.c.h.b16 %v448
        %v479 = vunpack.c.l.b16 %v449
        %v480 = vunpack.c.h.b16 %v449
        %v481 = vunpack.c.l.b16 %v450
        %v482 = vunpack.c.h.b16 %v450
        %v483 = vunpack.c.l.b16 %v451
        %v484 = vunpack.c.h.b16 %v451
        %v485 = vunpack.c.l.b16 %v452
        %v486 = vunpack.c.h.b16 %v452
        %v487 = vunpack.c.l.b16 %v453
        %v488 = vunpack.c.h.b16 %v453
        %v489 = vunpack.c.l.b16 %v454
        %v490 = vunpack.c.h.b16 %v454
        %v491 = vpack.c.b16 %v477, %v475
        %v492 = vpack.c.b16 %v478, %v476
        %v493 = vpack.c.b16 %v481, %v479
        %v494 = vpack.c.b16 %v482, %v480
        %v495 = vpack.c.b16 %v485, %v483
        %v496 = vpack.c.b16 %v486, %v484
        %v497 = vpack.c.b16 %v489, %v487
        %v498 = vpack.c.b16 %v490, %v488
        %vm507 = vcmask 523264
        %v509 = vsel %vm507, %v443, 0
        %v512 = vsel %vm507, %v444, 0
        %v515 = vsel %vm507, %v445, 0
        %v518 = vsel %vm507, %v446, 0
        %520 = vmatprep.subr.bf16.mxu0 0
        %521 = vmatpush1.bf16.msra.mxu0 0
        %522 = vmatprep.subr.bf16.mxu0 0
        %523 = vmatpush1.bf16.msra.mxu0 0
        %524 = vmatprep.subr.bf16.mxu0 0
        %525 = vmatpush1.bf16.msra.mxu0 0
        %526 = vmatprep.subr.bf16.mxu0 0
        %527 = vmatpush1.bf16.msra.mxu0 0
        %528 = vmatprep.subr.bf16.mxu0 %v498
        %529 = vmatpush1.bf16.msra.mxu0 %v497
        %530 = vmatprep.subr.bf16.mxu0 %v496
        %531 = vmatpush1.bf16.msra.mxu0 %v495
        %532 = vmatprep.subr.bf16.mxu0 %v494
        %533 = vmatpush1.bf16.msra.mxu0 %v493
        %534 = vmatprep.subr.bf16.mxu0 %v492
        %535 = vmatpush1.bf16.msra.mxu0 %v491
        %536 = vmatprep.subr.bf16.mxu0 0
        %537 = vmatpush2.bf16.msra.mxu0 0
        %538 = vmatprep.subr.bf16.mxu0 0
        %539 = vmatpush2.bf16.msra.mxu0 0
        %540 = vmatprep.subr.bf16.mxu0 0
        %541 = vmatpush2.bf16.msra.mxu0 0
        %542 = vmatprep.subr.bf16.mxu0 0
        %543 = vmatpush2.bf16.msra.mxu0 0
        %544 = vmatprep.subr.bf16.mxu0 0
        %545 = vmatpush2.bf16.msra.mxu0 0
        %546 = vmatprep.subr.bf16.mxu0 0
        %547 = vmatpush2.bf16.msra.mxu0 0
        %548 = vmatprep.subr.bf16.mxu0 0
        %549 = vmatpush2.bf16.msra.mxu0 0
        %550 = vmatprep.subr.bf16.mxu0 0
        %551 = vmatpush2.bf16.msra.mxu0 0
        %552 = vmatprep.mubr.bf16.mxu0 0
        %553 = vmatmul.mubr.bf16.gmra.mxu0 %v509
        %v554 = vpop.f32.mrf.mxu0
        %v555 = vadd.f32 %v460, %v554
        %v556 = vpop.f32.mrf.mxu0
        %v557 = vadd.f32 %v464, %v556
        %v558 = vpop.f32.mrf.mxu0
        %v559 = vadd.f32 %v460, %v558
        %v560 = vpop.f32.mrf.mxu0
        %v561 = vadd.f32 %v464, %v560
        %562 = vmatprep.mubr.bf16.mxu0 0
        %563 = vmatmul.mubr.bf16.gmra.mxu0 %v512
        %v564 = vpop.f32.mrf.mxu0
        %v565 = vadd.f32 %v460, %v564
        %v566 = vpop.f32.mrf.mxu0
        %v567 = vadd.f32 %v464, %v566
        %v568 = vpop.f32.mrf.mxu0
        %v569 = vadd.f32 %v460, %v568
        %v570 = vpop.f32.mrf.mxu0
        %v571 = vadd.f32 %v464, %v570
        %572 = vmatprep.mubr.bf16.mxu0 0
        %573 = vmatmul.mubr.bf16.gmra.mxu0 %v515
        %v574 = vpop.f32.mrf.mxu0
        %v575 = vadd.f32 %v460, %v574
        %v576 = vpop.f32.mrf.mxu0
        %v577 = vadd.f32 %v464, %v576
        %v578 = vpop.f32.mrf.mxu0
        %v579 = vadd.f32 %v460, %v578
        %v580 = vpop.f32.mrf.mxu0
        %v581 = vadd.f32 %v464, %v580
        %582 = vmatprep.mubr.bf16.mxu0 0
        %583 = vmatmul.mubr.bf16.gmra.mxu0 %v518
        %v584 = vpop.f32.mrf.mxu0
        %v585 = vadd.f32 %v460, %v584
        %v586 = vpop.f32.mrf.mxu0
        %v587 = vadd.f32 %v464, %v586
        %v588 = vpop.f32.mrf.mxu0
        %v589 = vadd.f32 %v460, %v588
        %v590 = vpop.f32.mrf.mxu0
        %v591 = vadd.f32 %v464, %v590
        %592 = vdwg.mxu0
        %v593 = vmax.f32 %v555, 0.0
        %v594 = vmax.f32 %v557, 0.0
        %v595 = vmax.f32 %v559, 0.0
        %v596 = vmax.f32 %v561, 0.0
        %v597 = vmax.f32 %v565, 0.0
        %v598 = vmax.f32 %v567, 0.0
        %v599 = vmax.f32 %v569, 0.0
        %v600 = vmax.f32 %v571, 0.0
        %v601 = vmax.f32 %v575, 0.0
        %v602 = vmax.f32 %v577, 0.0
        %v603 = vmax.f32 %v579, 0.0
        %v604 = vmax.f32 %v581, 0.0
        %v605 = vmax.f32 %v585, 0.0
        %v606 = vmax.f32 %v587, 0.0
        %v607 = vmax.f32 %v589, 0.0
        %v608 = vmax.f32 %v591, 0.0
        %v609 = vpack.c.bf16 %v595, %v593
        %v610 = vpack.c.bf16 %v596, %v594
        %v611 = vpack.c.bf16 %v599, %v597
        %v612 = vpack.c.bf16 %v600, %v598
        %v613 = vpack.c.bf16 %v603, %v601
        %v614 = vpack.c.bf16 %v604, %v602
        %v615 = vpack.c.bf16 %v607, %v605
        %v616 = vpack.c.bf16 %v608, %v606
        %v617 = vld [vmem:[%s3] sm:$0xff]
        %v618 = vld [vmem:[%s3 + $0x8] sm:$0xff]
        %v619 = vld [vmem:[%s3 + $0x10] sm:$0xff]
        %v620 = vld [vmem:[%s3 + $0x18] sm:$0xff]
        %v621 = vld [vmem:[%s3 + $0x20] sm:$0xff]
        %v622 = vld [vmem:[%s3 + $0x28] sm:$0xff]
        %v623 = vld [vmem:[%s3 + $0x30] sm:$0xff]
        %v624 = vld [vmem:[%s3 + $0x38] sm:$0xff]
        %v625 = vld [vmem:[%s3 + $0x40] sm:$0xff]
        %v626 = vld [vmem:[%s3 + $0x48] sm:$0xff]
        %v627 = vld [vmem:[%s3 + $0x50] sm:$0xff]
        %v628 = vld [vmem:[%s3 + $0x58] sm:$0xff]
        %v629 = vld [vmem:[%s3 + $0x60] sm:$0xff]
        %v630 = vld [vmem:[%s3 + $0x68] sm:$0xff]
        %v631 = vld [vmem:[%s3 + $0x70] sm:$0xff]
        %v632 = vld [vmem:[%s3 + $0x78] sm:$0xff]
        %v633 = vld [vmem:[%s3 + $0x80] sm:$0xff]
        %v634 = vld [vmem:[%s3 + $0x88] sm:$0xff]
        %v635 = vld [vmem:[%s3 + $0x90] sm:$0xff]
        %v636 = vld [vmem:[%s3 + $0x98] sm:$0xff]
        %v637 = vld [vmem:[%s3 + $0xa0] sm:$0xff]
        %v638 = vld [vmem:[%s3 + $0xa8] sm:$0xff]
        %v639 = vld [vmem:[%s3 + $0xb0] sm:$0xff]
        %v640 = vld [vmem:[%s3 + $0xb8] sm:$0xff]
        %v641 = vld [vmem:[%s3 + $0xc0] sm:$0xff]
        %v642 = vld [vmem:[%s3 + $0xc8] sm:$0xff]
        %v643 = vld [vmem:[%s3 + $0xd0] sm:$0xff]
        %v644 = vld [vmem:[%s3 + $0xd8] sm:$0xff]
        %v645 = vld [vmem:[%s3 + $0xe0] sm:$0xff]
        %v646 = vld [vmem:[%s3 + $0xe8] sm:$0xff]
        %v647 = vld [vmem:[%s3 + $0xf0] sm:$0xff]
        %v648 = vld [vmem:[%s3 + $0xf8] sm:$0xff]
        %v649 = vld [vmem:[%s4] sm:$0x3]
        %v651 = vlaneseq
        %v652 = vshrl.u32 %v651, 7
        %v653 = vsub.s32 0, %v652
        %v654 = vrot.slane %v649, %v653
        %v655 = vlaneseq
        %v656 = vshrl.u32 %v655, 7
        %v657 = vsub.s32 1, %v656
        %v658 = vrot.slane %v649, %v657
        %v693 = vunpack.c.l.b16 %v617
        %v694 = vunpack.c.h.b16 %v617
        %v695 = vunpack.c.l.b16 %v618
        %v696 = vunpack.c.h.b16 %v618
        %v697 = vunpack.c.l.b16 %v619
        %v698 = vunpack.c.h.b16 %v619
        %v699 = vunpack.c.l.b16 %v620
        %v700 = vunpack.c.h.b16 %v620
        %v701 = vunpack.c.l.b16 %v621
        %v702 = vunpack.c.h.b16 %v621
        %v703 = vunpack.c.l.b16 %v622
        %v704 = vunpack.c.h.b16 %v622
        %v705 = vunpack.c.l.b16 %v623
        %v706 = vunpack.c.h.b16 %v623
        %v707 = vunpack.c.l.b16 %v624
        %v708 = vunpack.c.h.b16 %v624
        %v709 = vunpack.c.l.b16 %v625
        %v710 = vunpack.c.h.b16 %v625
        %v711 = vunpack.c.l.b16 %v626
        %v712 = vunpack.c.h.b16 %v626
        %v713 = vunpack.c.l.b16 %v627
        %v714 = vunpack.c.h.b16 %v627
        %v715 = vunpack.c.l.b16 %v628
        %v716 = vunpack.c.h.b16 %v628
        %v717 = vunpack.c.l.b16 %v629
        %v718 = vunpack.c.h.b16 %v629
        %v719 = vunpack.c.l.b16 %v630
        %v720 = vunpack.c.h.b16 %v630
        %v721 = vunpack.c.l.b16 %v631
        %v722 = vunpack.c.h.b16 %v631
        %v723 = vunpack.c.l.b16 %v632
        %v724 = vunpack.c.h.b16 %v632
        %v725 = vunpack.c.l.b16 %v633
        %v726 = vunpack.c.h.b16 %v633
        %v727 = vunpack.c.l.b16 %v634
        %v728 = vunpack.c.h.b16 %v634
        %v729 = vunpack.c.l.b16 %v635
        %v730 = vunpack.c.h.b16 %v635
        %v731 = vunpack.c.l.b16 %v636
        %v732 = vunpack.c.h.b16 %v636
        %v733 = vunpack.c.l.b16 %v637
        %v734 = vunpack.c.h.b16 %v637
        %v735 = vunpack.c.l.b16 %v638
        %v736 = vunpack.c.h.b16 %v638
        %v737 = vunpack.c.l.b16 %v639
        %v738 = vunpack.c.h.b16 %v639
        %v739 = vunpack.c.l.b16 %v640
        %v740 = vunpack.c.h.b16 %v640
        %v741 = vunpack.c.l.b16 %v641
        %v742 = vunpack.c.h.b16 %v641
        %v743 = vunpack.c.l.b16 %v642
        %v744 = vunpack.c.h.b16 %v642
        %v745 = vunpack.c.l.b16 %v643
        %v746 = vunpack.c.h.b16 %v643
        %v747 = vunpack.c.l.b16 %v644
        %v748 = vunpack.c.h.b16 %v644
        %v749 = vunpack.c.l.b16 %v645
        %v750 = vunpack.c.h.b16 %v645
        %v751 = vunpack.c.l.b16 %v646
        %v752 = vunpack.c.h.b16 %v646
        %v753 = vunpack.c.l.b16 %v647
        %v754 = vunpack.c.h.b16 %v647
        %v755 = vunpack.c.l.b16 %v648
        %v756 = vunpack.c.h.b16 %v648
        %v757 = vpack.c.b16 %v695, %v693
        %v758 = vpack.c.b16 %v696, %v694
        %v759 = vpack.c.b16 %v699, %v697
        %v760 = vpack.c.b16 %v700, %v698
        %v761 = vpack.c.b16 %v703, %v701
        %v762 = vpack.c.b16 %v704, %v702
        %v763 = vpack.c.b16 %v707, %v705
        %v764 = vpack.c.b16 %v708, %v706
        %v765 = vpack.c.b16 %v711, %v709
        %v766 = vpack.c.b16 %v712, %v710
        %v767 = vpack.c.b16 %v715, %v713
        %v768 = vpack.c.b16 %v716, %v714
        %v769 = vpack.c.b16 %v719, %v717
        %v770 = vpack.c.b16 %v720, %v718
        %v771 = vpack.c.b16 %v723, %v721
        %v772 = vpack.c.b16 %v724, %v722
        %v773 = vpack.c.b16 %v727, %v725
        %v774 = vpack.c.b16 %v728, %v726
        %v775 = vpack.c.b16 %v731, %v729
        %v776 = vpack.c.b16 %v732, %v730
        %v777 = vpack.c.b16 %v735, %v733
        %v778 = vpack.c.b16 %v736, %v734
        %v779 = vpack.c.b16 %v739, %v737
        %v780 = vpack.c.b16 %v740, %v738
        %v781 = vpack.c.b16 %v743, %v741
        %v782 = vpack.c.b16 %v744, %v742
        %v783 = vpack.c.b16 %v747, %v745
        %v784 = vpack.c.b16 %v748, %v746
        %v785 = vpack.c.b16 %v751, %v749
        %v786 = vpack.c.b16 %v752, %v750
        %v787 = vpack.c.b16 %v755, %v753
        %v788 = vpack.c.b16 %v756, %v754
        %821 = vmatprep.subr.bf16.mxu0 %v772
        %822 = vmatpush1.bf16.msra.mxu0 %v771
        %823 = vmatprep.subr.bf16.mxu0 %v770
        %824 = vmatpush1.bf16.msra.mxu0 %v769
        %825 = vmatprep.subr.bf16.mxu0 %v768
        %826 = vmatpush1.bf16.msra.mxu0 %v767
        %827 = vmatprep.subr.bf16.mxu0 %v766
        %828 = vmatpush1.bf16.msra.mxu0 %v765
        %829 = vmatprep.subr.bf16.mxu0 %v764
        %830 = vmatpush1.bf16.msra.mxu0 %v763
        %831 = vmatprep.subr.bf16.mxu0 %v762
        %832 = vmatpush1.bf16.msra.mxu0 %v761
        %833 = vmatprep.subr.bf16.mxu0 %v760
        %834 = vmatpush1.bf16.msra.mxu0 %v759
        %835 = vmatprep.subr.bf16.mxu0 %v758
        %836 = vmatpush1.bf16.msra.mxu0 %v757
        %837 = vmatprep.subr.bf16.mxu0 %v788
        %838 = vmatpush2.bf16.msra.mxu0 %v787
        %839 = vmatprep.subr.bf16.mxu0 %v786
        %840 = vmatpush2.bf16.msra.mxu0 %v785
        %841 = vmatprep.subr.bf16.mxu0 %v784
        %842 = vmatpush2.bf16.msra.mxu0 %v783
        %843 = vmatprep.subr.bf16.mxu0 %v782
        %844 = vmatpush2.bf16.msra.mxu0 %v781
        %845 = vmatprep.subr.bf16.mxu0 %v780
        %846 = vmatpush2.bf16.msra.mxu0 %v779
        %847 = vmatprep.subr.bf16.mxu0 %v778
        %848 = vmatpush2.bf16.msra.mxu0 %v777
        %849 = vmatprep.subr.bf16.mxu0 %v776
        %850 = vmatpush2.bf16.msra.mxu0 %v775
        %851 = vmatprep.subr.bf16.mxu0 %v774
        %852 = vmatpush2.bf16.msra.mxu0 %v773
        %853 = vmatprep.mubr.bf16.mxu0 %v610
        %854 = vmatmul.mubr.bf16.gmra.mxu0 %v609
        %v855 = vpop.f32.mrf.mxu0
        %v856 = vadd.f32 %v654, %v855
        %v857 = vpop.f32.mrf.mxu0
        %v858 = vadd.f32 %v658, %v857
        %v859 = vpop.f32.mrf.mxu0
        %v860 = vadd.f32 %v654, %v859
        %v861 = vpop.f32.mrf.mxu0
        %v862 = vadd.f32 %v658, %v861
        %863 = vmatprep.mubr.bf16.mxu0 %v612
        %864 = vmatmul.mubr.bf16.gmra.mxu0 %v611
        %v865 = vpop.f32.mrf.mxu0
        %v866 = vadd.f32 %v654, %v865
        %v867 = vpop.f32.mrf.mxu0
        %v868 = vadd.f32 %v658, %v867
        %v869 = vpop.f32.mrf.mxu0
        %v870 = vadd.f32 %v654, %v869
        %v871 = vpop.f32.mrf.mxu0
        %v872 = vadd.f32 %v658, %v871
        %873 = vmatprep.mubr.bf16.mxu0 %v614
        %874 = vmatmul.mubr.bf16.gmra.mxu0 %v613
        %v875 = vpop.f32.mrf.mxu0
        %v876 = vadd.f32 %v654, %v875
        %v877 = vpop.f32.mrf.mxu0
        %v878 = vadd.f32 %v658, %v877
        %v879 = vpop.f32.mrf.mxu0
        %v880 = vadd.f32 %v654, %v879
        %v881 = vpop.f32.mrf.mxu0
        %v882 = vadd.f32 %v658, %v881
        %883 = vmatprep.mubr.bf16.mxu0 %v616
        %884 = vmatmul.mubr.bf16.gmra.mxu0 %v615
        %v885 = vpop.f32.mrf.mxu0
        %v886 = vadd.f32 %v654, %v885
        %v887 = vpop.f32.mrf.mxu0
        %v888 = vadd.f32 %v658, %v887
        %v889 = vpop.f32.mrf.mxu0
        %v890 = vadd.f32 %v654, %v889
        %v891 = vpop.f32.mrf.mxu0
        %v892 = vadd.f32 %v658, %v891
        %893 = vdwg.mxu0
        %v894 = vmax.f32 %v856, 0.0
        %v895 = vmax.f32 %v858, 0.0
        %v896 = vmax.f32 %v860, 0.0
        %v897 = vmax.f32 %v862, 0.0
        %v898 = vmax.f32 %v866, 0.0
        %v899 = vmax.f32 %v868, 0.0
        %v900 = vmax.f32 %v870, 0.0
        %v901 = vmax.f32 %v872, 0.0
        %v902 = vmax.f32 %v876, 0.0
        %v903 = vmax.f32 %v878, 0.0
        %v904 = vmax.f32 %v880, 0.0
        %v905 = vmax.f32 %v882, 0.0
        %v906 = vmax.f32 %v886, 0.0
        %v907 = vmax.f32 %v888, 0.0
        %v908 = vmax.f32 %v890, 0.0
        %v909 = vmax.f32 %v892, 0.0
        %v910 = vpack.c.bf16 %v896, %v894
        %v911 = vpack.c.bf16 %v897, %v895
        %v912 = vpack.c.bf16 %v900, %v898
        %v913 = vpack.c.bf16 %v901, %v899
        %v914 = vpack.c.bf16 %v904, %v902
        %v915 = vpack.c.bf16 %v905, %v903
        %v916 = vpack.c.bf16 %v908, %v906
        %v917 = vpack.c.bf16 %v909, %v907
        %v918 = vld [vmem:[#allocation4] sm:$0xff]
        %v919 = vld [vmem:[#allocation4 + $0x8] sm:$0xff]
        %v920 = vld [vmem:[#allocation4 + $0x10] sm:$0xff]
        %v921 = vld [vmem:[#allocation4 + $0x18] sm:$0xff]
        %v922 = vld [vmem:[#allocation4 + $0x20] sm:$0xff]
        %v923 = vld [vmem:[#allocation4 + $0x28] sm:$0xff]
        %v924 = vld [vmem:[#allocation4 + $0x30] sm:$0xff]
        %v925 = vld [vmem:[#allocation4 + $0x38] sm:$0xff]
        %v926 = vld [vmem:[#allocation4 + $0x40] sm:$0xff]
        %v927 = vld [vmem:[#allocation4 + $0x48] sm:$0xff]
        %v928 = vld [vmem:[#allocation4 + $0x50] sm:$0xff]
        %v929 = vld [vmem:[#allocation4 + $0x58] sm:$0xff]
        %v930 = vld [vmem:[#allocation4 + $0x60] sm:$0xff]
        %v931 = vld [vmem:[#allocation4 + $0x68] sm:$0xff]
        %v932 = vld [vmem:[#allocation4 + $0x70] sm:$0xff]
        %v933 = vld [vmem:[#allocation4 + $0x78] sm:$0xff]
        %v934 = vld [vmem:[#allocation4 + $0x80] sm:$0xff]
        %v935 = vld [vmem:[#allocation4 + $0x88] sm:$0xff]
        %v936 = vld [vmem:[#allocation4 + $0x90] sm:$0xff]
        %v937 = vld [vmem:[#allocation4 + $0x98] sm:$0xff]
        %v938 = vld [vmem:[#allocation4 + $0xa0] sm:$0xff]
        %v939 = vld [vmem:[#allocation4 + $0xa8] sm:$0xff]
        %v940 = vld [vmem:[#allocation4 + $0xb0] sm:$0xff]
        %v941 = vld [vmem:[#allocation4 + $0xb8] sm:$0xff]
        %v942 = vld [vmem:[#allocation4 + $0xc0] sm:$0xff]
        %v943 = vld [vmem:[#allocation4 + $0xc8] sm:$0xff]
        %v944 = vld [vmem:[#allocation4 + $0xd0] sm:$0xff]
        %v945 = vld [vmem:[#allocation4 + $0xd8] sm:$0xff]
        %v946 = vld [vmem:[#allocation4 + $0xe0] sm:$0xff]
        %v947 = vld [vmem:[#allocation4 + $0xe8] sm:$0xff]
        %v948 = vld [vmem:[#allocation4 + $0xf0] sm:$0xff]
        %v949 = vld [vmem:[#allocation4 + $0xf8] sm:$0xff]
        %v950 = vld [vmem:[%s6] sm:$0x3]
        %v952 = vlaneseq
        %v953 = vshrl.u32 %v952, 7
        %v954 = vsub.s32 0, %v953
        %v955 = vrot.slane %v950, %v954
        %v956 = vlaneseq
        %v957 = vshrl.u32 %v956, 7
        %v958 = vsub.s32 1, %v957
        %v959 = vrot.slane %v950, %v958
        %v994 = vunpack.c.l.b16 %v918
        %v995 = vunpack.c.h.b16 %v918
        %v996 = vunpack.c.l.b16 %v919
        %v997 = vunpack.c.h.b16 %v919
        %v998 = vunpack.c.l.b16 %v920
        %v999 = vunpack.c.h.b16 %v920
        %v1000 = vunpack.c.l.b16 %v921
        %v1001 = vunpack.c.h.b16 %v921
        %v1002 = vunpack.c.l.b16 %v922
        %v1003 = vunpack.c.h.b16 %v922
        %v1004 = vunpack.c.l.b16 %v923
        %v1005 = vunpack.c.h.b16 %v923
        %v1006 = vunpack.c.l.b16 %v924
        %v1007 = vunpack.c.h.b16 %v924
        %v1008 = vunpack.c.l.b16 %v925
        %v1009 = vunpack.c.h.b16 %v925
        %v1010 = vunpack.c.l.b16 %v926
        %v1011 = vunpack.c.h.b16 %v926
        %v1012 = vunpack.c.l.b16 %v927
        %v1013 = vunpack.c.h.b16 %v927
        %v1014 = vunpack.c.l.b16 %v928
        %v1015 = vunpack.c.h.b16 %v928
        %v1016 = vunpack.c.l.b16 %v929
        %v1017 = vunpack.c.h.b16 %v929
        %v1018 = vunpack.c.l.b16 %v930
        %v1019 = vunpack.c.h.b16 %v930
        %v1020 = vunpack.c.l.b16 %v931
        %v1021 = vunpack.c.h.b16 %v931
        %v1022 = vunpack.c.l.b16 %v932
        %v1023 = vunpack.c.h.b16 %v932
        %v1024 = vunpack.c.l.b16 %v933
        %v1025 = vunpack.c.h.b16 %v933
        %v1026 = vunpack.c.l.b16 %v934
        %v1027 = vunpack.c.h.b16 %v934
        %v1028 = vunpack.c.l.b16 %v935
        %v1029 = vunpack.c.h.b16 %v935
        %v1030 = vunpack.c.l.b16 %v936
        %v1031 = vunpack.c.h.b16 %v936
        %v1032 = vunpack.c.l.b16 %v937
        %v1033 = vunpack.c.h.b16 %v937
        %v1034 = vunpack.c.l.b16 %v938
        %v1035 = vunpack.c.h.b16 %v938
        %v1036 = vunpack.c.l.b16 %v939
        %v1037 = vunpack.c.h.b16 %v939
        %v1038 = vunpack.c.l.b16 %v940
        %v1039 = vunpack.c.h.b16 %v940
        %v1040 = vunpack.c.l.b16 %v941
        %v1041 = vunpack.c.h.b16 %v941
        %v1042 = vunpack.c.l.b16 %v942
        %v1043 = vunpack.c.h.b16 %v942
        %v1044 = vunpack.c.l.b16 %v943
        %v1045 = vunpack.c.h.b16 %v943
        %v1046 = vunpack.c.l.b16 %v944
        %v1047 = vunpack.c.h.b16 %v944
        %v1048 = vunpack.c.l.b16 %v945
        %v1049 = vunpack.c.h.b16 %v945
        %v1050 = vunpack.c.l.b16 %v946
        %v1051 = vunpack.c.h.b16 %v946
        %v1052 = vunpack.c.l.b16 %v947
        %v1053 = vunpack.c.h.b16 %v947
        %v1054 = vunpack.c.l.b16 %v948
        %v1055 = vunpack.c.h.b16 %v948
        %v1056 = vunpack.c.l.b16 %v949
        %v1057 = vunpack.c.h.b16 %v949
        %v1058 = vpack.c.b16 %v996, %v994
        %v1059 = vpack.c.b16 %v997, %v995
        %v1060 = vpack.c.b16 %v1000, %v998
        %v1061 = vpack.c.b16 %v1001, %v999
        %v1062 = vpack.c.b16 %v1004, %v1002
        %v1063 = vpack.c.b16 %v1005, %v1003
        %v1064 = vpack.c.b16 %v1008, %v1006
        %v1065 = vpack.c.b16 %v1009, %v1007
        %v1066 = vpack.c.b16 %v1012, %v1010
        %v1067 = vpack.c.b16 %v1013, %v1011
        %v1068 = vpack.c.b16 %v1016, %v1014
        %v1069 = vpack.c.b16 %v1017, %v1015
        %v1070 = vpack.c.b16 %v1020, %v1018
        %v1071 = vpack.c.b16 %v1021, %v1019
        %v1072 = vpack.c.b16 %v1024, %v1022
        %v1073 = vpack.c.b16 %v1025, %v1023
        %v1074 = vpack.c.b16 %v1028, %v1026
        %v1075 = vpack.c.b16 %v1029, %v1027
        %v1076 = vpack.c.b16 %v1032, %v1030
        %v1077 = vpack.c.b16 %v1033, %v1031
        %v1078 = vpack.c.b16 %v1036, %v1034
        %v1079 = vpack.c.b16 %v1037, %v1035
        %v1080 = vpack.c.b16 %v1040, %v1038
        %v1081 = vpack.c.b16 %v1041, %v1039
        %v1082 = vpack.c.b16 %v1044, %v1042
        %v1083 = vpack.c.b16 %v1045, %v1043
        %v1084 = vpack.c.b16 %v1048, %v1046
        %v1085 = vpack.c.b16 %v1049, %v1047
        %v1086 = vpack.c.b16 %v1052, %v1050
        %v1087 = vpack.c.b16 %v1053, %v1051
        %v1088 = vpack.c.b16 %v1056, %v1054
        %v1089 = vpack.c.b16 %v1057, %v1055
        %1122 = vmatprep.subr.bf16.mxu0 %v1073
        %1123 = vmatpush1.bf16.msra.mxu0 %v1072
        %1124 = vmatprep.subr.bf16.mxu0 %v1071
        %1125 = vmatpush1.bf16.msra.mxu0 %v1070
        %1126 = vmatprep.subr.bf16.mxu0 %v1069
        %1127 = vmatpush1.bf16.msra.mxu0 %v1068
        %1128 = vmatprep.subr.bf16.mxu0 %v1067
        %1129 = vmatpush1.bf16.msra.mxu0 %v1066
        %1130 = vmatprep.subr.bf16.mxu0 %v1065
        %1131 = vmatpush1.bf16.msra.mxu0 %v1064
        %1132 = vmatprep.subr.bf16.mxu0 %v1063
        %1133 = vmatpush1.bf16.msra.mxu0 %v1062
        %1134 = vmatprep.subr.bf16.mxu0 %v1061
        %1135 = vmatpush1.bf16.msra.mxu0 %v1060
        %1136 = vmatprep.subr.bf16.mxu0 %v1059
        %1137 = vmatpush1.bf16.msra.mxu0 %v1058
        %1138 = vmatprep.subr.bf16.mxu0 %v1089
        %1139 = vmatpush2.bf16.msra.mxu0 %v1088
        %1140 = vmatprep.subr.bf16.mxu0 %v1087
        %1141 = vmatpush2.bf16.msra.mxu0 %v1086
        %1142 = vmatprep.subr.bf16.mxu0 %v1085
        %1143 = vmatpush2.bf16.msra.mxu0 %v1084
        %1144 = vmatprep.subr.bf16.mxu0 %v1083
        %1145 = vmatpush2.bf16.msra.mxu0 %v1082
        %1146 = vmatprep.subr.bf16.mxu0 %v1081
        %1147 = vmatpush2.bf16.msra.mxu0 %v1080
        %1148 = vmatprep.subr.bf16.mxu0 %v1079
        %1149 = vmatpush2.bf16.msra.mxu0 %v1078
        %1150 = vmatprep.subr.bf16.mxu0 %v1077
        %1151 = vmatpush2.bf16.msra.mxu0 %v1076
        %1152 = vmatprep.subr.bf16.mxu0 %v1075
        %1153 = vmatpush2.bf16.msra.mxu0 %v1074
        %1154 = vmatprep.mubr.bf16.mxu0 %v911
        %1155 = vmatmul.mubr.bf16.gmra.mxu0 %v910
        %v1156 = vpop.f32.mrf.mxu0
        %v1157 = vadd.f32 %v955, %v1156
        %v1158 = vpop.f32.mrf.mxu0
        %v1159 = vadd.f32 %v959, %v1158
        %v1160 = vpop.f32.mrf.mxu0
        %v1161 = vadd.f32 %v955, %v1160
        %v1162 = vpop.f32.mrf.mxu0
        %v1163 = vadd.f32 %v959, %v1162
        %1164 = vmatprep.mubr.bf16.mxu0 %v913
        %1165 = vmatmul.mubr.bf16.gmra.mxu0 %v912
        %v1166 = vpop.f32.mrf.mxu0
        %v1167 = vadd.f32 %v955, %v1166
        %v1168 = vpop.f32.mrf.mxu0
        %v1169 = vadd.f32 %v959, %v1168
        %v1170 = vpop.f32.mrf.mxu0
        %v1171 = vadd.f32 %v955, %v1170
        %v1172 = vpop.f32.mrf.mxu0
        %v1173 = vadd.f32 %v959, %v1172
        %1174 = vmatprep.mubr.bf16.mxu0 %v915
        %1175 = vmatmul.mubr.bf16.gmra.mxu0 %v914
        %v1176 = vpop.f32.mrf.mxu0
        %v1177 = vadd.f32 %v955, %v1176
        %v1178 = vpop.f32.mrf.mxu0
        %v1179 = vadd.f32 %v959, %v1178
        %v1180 = vpop.f32.mrf.mxu0
        %v1181 = vadd.f32 %v955, %v1180
        %v1182 = vpop.f32.mrf.mxu0
        %v1183 = vadd.f32 %v959, %v1182
        %1184 = vmatprep.mubr.bf16.mxu0 %v917
        %1185 = vmatmul.mubr.bf16.gmra.mxu0 %v916
        %v1186 = vpop.f32.mrf.mxu0
        %v1187 = vadd.f32 %v955, %v1186
        %v1188 = vpop.f32.mrf.mxu0
        %v1189 = vadd.f32 %v959, %v1188
        %v1190 = vpop.f32.mrf.mxu0
        %v1191 = vadd.f32 %v955, %v1190
        %v1192 = vpop.f32.mrf.mxu0
        %v1193 = vadd.f32 %v959, %v1192
        %1194 = vdwg.mxu0
        %v1195 = vmax.f32 %v1157, 0.0
        %v1196 = vmax.f32 %v1159, 0.0
        %v1197 = vmax.f32 %v1161, 0.0
        %v1198 = vmax.f32 %v1163, 0.0
        %v1199 = vmax.f32 %v1167, 0.0
        %v1200 = vmax.f32 %v1169, 0.0
        %v1201 = vmax.f32 %v1171, 0.0
        %v1202 = vmax.f32 %v1173, 0.0
        %v1203 = vmax.f32 %v1177, 0.0
        %v1204 = vmax.f32 %v1179, 0.0
        %v1205 = vmax.f32 %v1181, 0.0
        %v1206 = vmax.f32 %v1183, 0.0
        %v1207 = vmax.f32 %v1187, 0.0
        %v1208 = vmax.f32 %v1189, 0.0
        %v1209 = vmax.f32 %v1191, 0.0
        %v1210 = vmax.f32 %v1193, 0.0
        %v1211 = vpack.c.bf16 %v1197, %v1195
        %v1212 = vpack.c.bf16 %v1198, %v1196
        %v1213 = vpack.c.bf16 %v1201, %v1199
        %v1214 = vpack.c.bf16 %v1202, %v1200
        %v1215 = vpack.c.bf16 %v1205, %v1203
        %v1216 = vpack.c.bf16 %v1206, %v1204
        %v1217 = vpack.c.bf16 %v1209, %v1207
        %v1218 = vpack.c.bf16 %v1210, %v1208
        %v1219 = vld [vmem:[#allocation6] sm:$0xff]
        %v1220 = vld [vmem:[#allocation6 + $0x8] sm:$0xff]
        %v1221 = vld [vmem:[#allocation6 + $0x10] sm:$0xff]
        %v1222 = vld [vmem:[#allocation6 + $0x18] sm:$0xff]
        %v1223 = vld [vmem:[#allocation6 + $0x20] sm:$0xff]
        %v1224 = vld [vmem:[#allocation6 + $0x28] sm:$0xff]
        %v1225 = vld [vmem:[#allocation6 + $0x30] sm:$0xff]
        %v1226 = vld [vmem:[#allocation6 + $0x38] sm:$0xff]
        %v1227 = vld [vmem:[#allocation6 + $0x40] sm:$0xff]
        %v1228 = vld [vmem:[#allocation6 + $0x48] sm:$0xff]
        %v1229 = vld [vmem:[#allocation6 + $0x50] sm:$0xff]
        %v1230 = vld [vmem:[#allocation6 + $0x58] sm:$0xff]
        %v1231 = vld [vmem:[#allocation6 + $0x60] sm:$0xff]
        %v1232 = vld [vmem:[#allocation6 + $0x68] sm:$0xff]
        %v1233 = vld [vmem:[#allocation6 + $0x70] sm:$0xff]
        %v1234 = vld [vmem:[#allocation6 + $0x78] sm:$0xff]
        %v1235 = vld [vmem:[#allocation6 + $0x80] sm:$0xff]
        %v1236 = vld [vmem:[#allocation6 + $0x88] sm:$0xff]
        %v1237 = vld [vmem:[#allocation6 + $0x90] sm:$0xff]
        %v1238 = vld [vmem:[#allocation6 + $0x98] sm:$0xff]
        %v1239 = vld [vmem:[#allocation6 + $0xa0] sm:$0xff]
        %v1240 = vld [vmem:[#allocation6 + $0xa8] sm:$0xff]
        %v1241 = vld [vmem:[#allocation6 + $0xb0] sm:$0xff]
        %v1242 = vld [vmem:[#allocation6 + $0xb8] sm:$0xff]
        %v1243 = vld [vmem:[#allocation6 + $0xc0] sm:$0xff]
        %v1244 = vld [vmem:[#allocation6 + $0xc8] sm:$0xff]
        %v1245 = vld [vmem:[#allocation6 + $0xd0] sm:$0xff]
        %v1246 = vld [vmem:[#allocation6 + $0xd8] sm:$0xff]
        %v1247 = vld [vmem:[#allocation6 + $0xe0] sm:$0xff]
        %v1248 = vld [vmem:[#allocation6 + $0xe8] sm:$0xff]
        %v1249 = vld [vmem:[#allocation6 + $0xf0] sm:$0xff]
        %v1250 = vld [vmem:[#allocation6 + $0xf8] sm:$0xff]
        %v1251 = vld [vmem:[%s8] sm:$0x3]
        %v1253 = vlaneseq
        %v1254 = vshrl.u32 %v1253, 7
        %v1255 = vsub.s32 0, %v1254
        %v1256 = vrot.slane %v1251, %v1255
        %v1257 = vlaneseq
        %v1258 = vshrl.u32 %v1257, 7
        %v1259 = vsub.s32 1, %v1258
        %v1260 = vrot.slane %v1251, %v1259
        %v1295 = vunpack.c.l.b16 %v1219
        %v1296 = vunpack.c.h.b16 %v1219
        %v1297 = vunpack.c.l.b16 %v1220
        %v1298 = vunpack.c.h.b16 %v1220
        %v1299 = vunpack.c.l.b16 %v1221
        %v1300 = vunpack.c.h.b16 %v1221
        %v1301 = vunpack.c.l.b16 %v1222
        %v1302 = vunpack.c.h.b16 %v1222
        %v1303 = vunpack.c.l.b16 %v1223
        %v1304 = vunpack.c.h.b16 %v1223
        %v1305 = vunpack.c.l.b16 %v1224
        %v1306 = vunpack.c.h.b16 %v1224
        %v1307 = vunpack.c.l.b16 %v1225
        %v1308 = vunpack.c.h.b16 %v1225
        %v1309 = vunpack.c.l.b16 %v1226
        %v1310 = vunpack.c.h.b16 %v1226
        %v1311 = vunpack.c.l.b16 %v1227
        %v1312 = vunpack.c.h.b16 %v1227
        %v1313 = vunpack.c.l.b16 %v1228
        %v1314 = vunpack.c.h.b16 %v1228
        %v1315 = vunpack.c.l.b16 %v1229
        %v1316 = vunpack.c.h.b16 %v1229
        %v1317 = vunpack.c.l.b16 %v1230
        %v1318 = vunpack.c.h.b16 %v1230
        %v1319 = vunpack.c.l.b16 %v1231
        %v1320 = vunpack.c.h.b16 %v1231
        %v1321 = vunpack.c.l.b16 %v1232
        %v1322 = vunpack.c.h.b16 %v1232
        %v1323 = vunpack.c.l.b16 %v1233
        %v1324 = vunpack.c.h.b16 %v1233
        %v1325 = vunpack.c.l.b16 %v1234
        %v1326 = vunpack.c.h.b16 %v1234
        %v1327 = vunpack.c.l.b16 %v1235
        %v1328 = vunpack.c.h.b16 %v1235
        %v1329 = vunpack.c.l.b16 %v1236
        %v1330 = vunpack.c.h.b16 %v1236
        %v1331 = vunpack.c.l.b16 %v1237
        %v1332 = vunpack.c.h.b16 %v1237
        %v1333 = vunpack.c.l.b16 %v1238
        %v1334 = vunpack.c.h.b16 %v1238
        %v1335 = vunpack.c.l.b16 %v1239
        %v1336 = vunpack.c.h.b16 %v1239
        %v1337 = vunpack.c.l.b16 %v1240
        %v1338 = vunpack.c.h.b16 %v1240
        %v1339 = vunpack.c.l.b16 %v1241
        %v1340 = vunpack.c.h.b16 %v1241
        %v1341 = vunpack.c.l.b16 %v1242
        %v1342 = vunpack.c.h.b16 %v1242
        %v1343 = vunpack.c.l.b16 %v1243
        %v1344 = vunpack.c.h.b16 %v1243
        %v1345 = vunpack.c.l.b16 %v1244
        %v1346 = vunpack.c.h.b16 %v1244
        %v1347 = vunpack.c.l.b16 %v1245
        %v1348 = vunpack.c.h.b16 %v1245
        %v1349 = vunpack.c.l.b16 %v1246
        %v1350 = vunpack.c.h.b16 %v1246
        %v1351 = vunpack.c.l.b16 %v1247
        %v1352 = vunpack.c.h.b16 %v1247
        %v1353 = vunpack.c.l.b16 %v1248
        %v1354 = vunpack.c.h.b16 %v1248
        %v1355 = vunpack.c.l.b16 %v1249
        %v1356 = vunpack.c.h.b16 %v1249
        %v1357 = vunpack.c.l.b16 %v1250
        %v1358 = vunpack.c.h.b16 %v1250
        %v1359 = vpack.c.b16 %v1297, %v1295
        %v1360 = vpack.c.b16 %v1298, %v1296
        %v1361 = vpack.c.b16 %v1301, %v1299
        %v1362 = vpack.c.b16 %v1302, %v1300
        %v1363 = vpack.c.b16 %v1305, %v1303
        %v1364 = vpack.c.b16 %v1306, %v1304
        %v1365 = vpack.c.b16 %v1309, %v1307
        %v1366 = vpack.c.b16 %v1310, %v1308
        %v1367 = vpack.c.b16 %v1313, %v1311
        %v1368 = vpack.c.b16 %v1314, %v1312
        %v1369 = vpack.c.b16 %v1317, %v1315
        %v1370 = vpack.c.b16 %v1318, %v1316
        %v1371 = vpack.c.b16 %v1321, %v1319
        %v1372 = vpack.c.b16 %v1322, %v1320
        %v1373 = vpack.c.b16 %v1325, %v1323
        %v1374 = vpack.c.b16 %v1326, %v1324
        %v1375 = vpack.c.b16 %v1329, %v1327
        %v1376 = vpack.c.b16 %v1330, %v1328
        %v1377 = vpack.c.b16 %v1333, %v1331
        %v1378 = vpack.c.b16 %v1334, %v1332
        %v1379 = vpack.c.b16 %v1337, %v1335
        %v1380 = vpack.c.b16 %v1338, %v1336
        %v1381 = vpack.c.b16 %v1341, %v1339
        %v1382 = vpack.c.b16 %v1342, %v1340
        %v1383 = vpack.c.b16 %v1345, %v1343
        %v1384 = vpack.c.b16 %v1346, %v1344
        %v1385 = vpack.c.b16 %v1349, %v1347
        %v1386 = vpack.c.b16 %v1350, %v1348
        %v1387 = vpack.c.b16 %v1353, %v1351
        %v1388 = vpack.c.b16 %v1354, %v1352
        %v1389 = vpack.c.b16 %v1357, %v1355
        %v1390 = vpack.c.b16 %v1358, %v1356
        %1423 = vmatprep.subr.bf16.mxu0 %v1374
        %1424 = vmatpush1.bf16.msra.mxu0 %v1373
        %1425 = vmatprep.subr.bf16.mxu0 %v1372
        %1426 = vmatpush1.bf16.msra.mxu0 %v1371
        %1427 = vmatprep.subr.bf16.mxu0 %v1370
        %1428 = vmatpush1.bf16.msra.mxu0 %v1369
        %1429 = vmatprep.subr.bf16.mxu0 %v1368
        %1430 = vmatpush1.bf16.msra.mxu0 %v1367
        %1431 = vmatprep.subr.bf16.mxu0 %v1366
        %1432 = vmatpush1.bf16.msra.mxu0 %v1365
        %1433 = vmatprep.subr.bf16.mxu0 %v1364
        %1434 = vmatpush1.bf16.msra.mxu0 %v1363
        %1435 = vmatprep.subr.bf16.mxu0 %v1362
        %1436 = vmatpush1.bf16.msra.mxu0 %v1361
        %1437 = vmatprep.subr.bf16.mxu0 %v1360
        %1438 = vmatpush1.bf16.msra.mxu0 %v1359
        %1439 = vmatprep.subr.bf16.mxu0 %v1390
        %1440 = vmatpush2.bf16.msra.mxu0 %v1389
        %1441 = vmatprep.subr.bf16.mxu0 %v1388
        %1442 = vmatpush2.bf16.msra.mxu0 %v1387
        %1443 = vmatprep.subr.bf16.mxu0 %v1386
        %1444 = vmatpush2.bf16.msra.mxu0 %v1385
        %1445 = vmatprep.subr.bf16.mxu0 %v1384
        %1446 = vmatpush2.bf16.msra.mxu0 %v1383
        %1447 = vmatprep.subr.bf16.mxu0 %v1382
        %1448 = vmatpush2.bf16.msra.mxu0 %v1381
        %1449 = vmatprep.subr.bf16.mxu0 %v1380
        %1450 = vmatpush2.bf16.msra.mxu0 %v1379
        %1451 = vmatprep.subr.bf16.mxu0 %v1378
        %1452 = vmatpush2.bf16.msra.mxu0 %v1377
        %1453 = vmatprep.subr.bf16.mxu0 %v1376
        %1454 = vmatpush2.bf16.msra.mxu0 %v1375
        %1455 = vmatprep.mubr.bf16.mxu0 %v1212
        %1456 = vmatmul.mubr.bf16.gmra.mxu0 %v1211
        %v1457 = vpop.f32.mrf.mxu0
        %v1458 = vadd.f32 %v1256, %v1457
        %v1459 = vpop.f32.mrf.mxu0
        %v1460 = vadd.f32 %v1260, %v1459
        %v1461 = vpop.f32.mrf.mxu0
        %v1462 = vadd.f32 %v1256, %v1461
        %v1463 = vpop.f32.mrf.mxu0
        %v1464 = vadd.f32 %v1260, %v1463
        %1465 = vmatprep.mubr.bf16.mxu0 %v1214
        %1466 = vmatmul.mubr.bf16.gmra.mxu0 %v1213
        %v1467 = vpop.f32.mrf.mxu0
        %v1468 = vadd.f32 %v1256, %v1467
        %v1469 = vpop.f32.mrf.mxu0
        %v1470 = vadd.f32 %v1260, %v1469
        %v1471 = vpop.f32.mrf.mxu0
        %v1472 = vadd.f32 %v1256, %v1471
        %v1473 = vpop.f32.mrf.mxu0
        %v1474 = vadd.f32 %v1260, %v1473
        %1475 = vmatprep.mubr.bf16.mxu0 %v1216
        %1476 = vmatmul.mubr.bf16.gmra.mxu0 %v1215
        %v1477 = vpop.f32.mrf.mxu0
        %v1478 = vadd.f32 %v1256, %v1477
        %v1479 = vpop.f32.mrf.mxu0
        %v1480 = vadd.f32 %v1260, %v1479
        %v1481 = vpop.f32.mrf.mxu0
        %v1482 = vadd.f32 %v1256, %v1481
        %v1483 = vpop.f32.mrf.mxu0
        %v1484 = vadd.f32 %v1260, %v1483
        %1485 = vmatprep.mubr.bf16.mxu0 %v1218
        %1486 = vmatmul.mubr.bf16.gmra.mxu0 %v1217
        %v1487 = vpop.f32.mrf.mxu0
        %v1488 = vadd.f32 %v1256, %v1487
        %v1489 = vpop.f32.mrf.mxu0
        %v1490 = vadd.f32 %v1260, %v1489
        %v1491 = vpop.f32.mrf.mxu0
        %v1492 = vadd.f32 %v1256, %v1491
        %v1493 = vpop.f32.mrf.mxu0
        %v1494 = vadd.f32 %v1260, %v1493
        %1495 = vdwg.mxu0
        %v1496 = vmax.f32 %v1458, 0.0
        %v1497 = vmax.f32 %v1460, 0.0
        %v1498 = vmax.f32 %v1462, 0.0
        %v1499 = vmax.f32 %v1464, 0.0
        %v1500 = vmax.f32 %v1468, 0.0
        %v1501 = vmax.f32 %v1470, 0.0
        %v1502 = vmax.f32 %v1472, 0.0
        %v1503 = vmax.f32 %v1474, 0.0
        %v1504 = vmax.f32 %v1478, 0.0
        %v1505 = vmax.f32 %v1480, 0.0
        %v1506 = vmax.f32 %v1482, 0.0
        %v1507 = vmax.f32 %v1484, 0.0
        %v1508 = vmax.f32 %v1488, 0.0
        %v1509 = vmax.f32 %v1490, 0.0
        %v1510 = vmax.f32 %v1492, 0.0
        %v1511 = vmax.f32 %v1494, 0.0
        %v1512 = vpack.c.bf16 %v1498, %v1496
        %v1513 = vpack.c.bf16 %v1499, %v1497
        %v1514 = vpack.c.bf16 %v1502, %v1500
        %v1515 = vpack.c.bf16 %v1503, %v1501
        %v1516 = vpack.c.bf16 %v1506, %v1504
        %v1517 = vpack.c.bf16 %v1507, %v1505
        %v1518 = vpack.c.bf16 %v1510, %v1508
        %v1519 = vpack.c.bf16 %v1511, %v1509
        %v1520 = vld [vmem:[%s9] sm:$0xf]
        %v1521 = vld [vmem:[%s9 + $0x4] sm:$0xf]
        %v1522 = vld [vmem:[%s9 + $0x8] sm:$0xf]
        %v1523 = vld [vmem:[%s9 + $0xc] sm:$0xf]
        %v1524 = vld [vmem:[%s9 + $0x10] sm:$0xf]
        %v1525 = vld [vmem:[%s9 + $0x14] sm:$0xf]
        %v1526 = vld [vmem:[%s9 + $0x18] sm:$0xf]
        %v1527 = vld [vmem:[%s9 + $0x1c] sm:$0xf]
        %v1528 = vld [vmem:[%s9 + $0x20] sm:$0xf]
        %v1529 = vld [vmem:[%s9 + $0x24] sm:$0xf]
        %v1530 = vld [vmem:[%s9 + $0x28] sm:$0xf]
        %v1531 = vld [vmem:[%s9 + $0x2c] sm:$0xf]
        %v1532 = vld [vmem:[%s9 + $0x30] sm:$0xf]
        %v1533 = vld [vmem:[%s9 + $0x34] sm:$0xf]
        %v1534 = vld [vmem:[%s9 + $0x38] sm:$0xf]
        %v1535 = vld [vmem:[%s9 + $0x3c] sm:$0xf]
        %v1536 = vld [vmem:[%s9 + $0x40] sm:$0xf]
        %v1537 = vld [vmem:[%s9 + $0x44] sm:$0xf]
        %v1538 = vld [vmem:[%s9 + $0x48] sm:$0xf]
        %v1539 = vld [vmem:[%s9 + $0x4c] sm:$0xf]
        %v1540 = vld [vmem:[%s9 + $0x50] sm:$0xf]
        %v1541 = vld [vmem:[%s9 + $0x54] sm:$0xf]
        %v1542 = vld [vmem:[%s9 + $0x58] sm:$0xf]
        %v1543 = vld [vmem:[%s9 + $0x5c] sm:$0xf]
        %v1544 = vld [vmem:[%s9 + $0x60] sm:$0xf]
        %v1545 = vld [vmem:[%s9 + $0x64] sm:$0xf]
        %v1546 = vld [vmem:[%s9 + $0x68] sm:$0xf]
        %v1547 = vld [vmem:[%s9 + $0x6c] sm:$0xf]
        %v1548 = vld [vmem:[%s9 + $0x70] sm:$0xf]
        %v1549 = vld [vmem:[%s9 + $0x74] sm:$0xf]
        %v1550 = vld [vmem:[%s9 + $0x78] sm:$0xf]
        %v1551 = vld [vmem:[%s9 + $0x7c] sm:$0xf]
        %v1552 = vld [vmem:[%s10] sm:$0x1]
        %v1554 = vlaneseq
        %v1555 = vshrl.u32 %v1554, 7
        %v1556 = vsub.s32 0, %v1555
        %v1557 = vrot.slane %v1552, %v1556
        %v1591 = vunpack.c.l.b16 %v1520
        %v1592 = vunpack.c.l.b16 %v1521
        %v1593 = vunpack.c.l.b16 %v1522
        %v1594 = vunpack.c.l.b16 %v1523
        %v1595 = vunpack.c.l.b16 %v1524
        %v1596 = vunpack.c.l.b16 %v1525
        %v1597 = vunpack.c.l.b16 %v1526
        %v1598 = vunpack.c.l.b16 %v1527
        %v1599 = vunpack.c.l.b16 %v1528
        %v1600 = vunpack.c.l.b16 %v1529
        %v1601 = vunpack.c.l.b16 %v1530
        %v1602 = vunpack.c.l.b16 %v1531
        %v1603 = vunpack.c.l.b16 %v1532
        %v1604 = vunpack.c.l.b16 %v1533
        %v1605 = vunpack.c.l.b16 %v1534
        %v1606 = vunpack.c.l.b16 %v1535
        %v1607 = vunpack.c.l.b16 %v1536
        %v1608 = vunpack.c.l.b16 %v1537
        %v1609 = vunpack.c.l.b16 %v1538
        %v1610 = vunpack.c.l.b16 %v1539
        %v1611 = vunpack.c.l.b16 %v1540
        %v1612 = vunpack.c.l.b16 %v1541
        %v1613 = vunpack.c.l.b16 %v1542
        %v1614 = vunpack.c.l.b16 %v1543
        %v1615 = vunpack.c.l.b16 %v1544
        %v1616 = vunpack.c.l.b16 %v1545
        %v1617 = vunpack.c.l.b16 %v1546
        %v1618 = vunpack.c.l.b16 %v1547
        %v1619 = vunpack.c.l.b16 %v1548
        %v1620 = vunpack.c.l.b16 %v1549
        %v1621 = vunpack.c.l.b16 %v1550
        %v1622 = vunpack.c.l.b16 %v1551
        %v1623 = vpack.c.b16 %v1592, %v1591
        %v1624 = vpack.c.b16 %v1594, %v1593
        %v1625 = vpack.c.b16 %v1596, %v1595
        %v1626 = vpack.c.b16 %v1598, %v1597
        %v1627 = vpack.c.b16 %v1600, %v1599
        %v1628 = vpack.c.b16 %v1602, %v1601
        %v1629 = vpack.c.b16 %v1604, %v1603
        %v1630 = vpack.c.b16 %v1606, %v1605
        %v1631 = vpack.c.b16 %v1608, %v1607
        %v1632 = vpack.c.b16 %v1610, %v1609
        %v1633 = vpack.c.b16 %v1612, %v1611
        %v1634 = vpack.c.b16 %v1614, %v1613
        %v1635 = vpack.c.b16 %v1616, %v1615
        %v1636 = vpack.c.b16 %v1618, %v1617
        %v1637 = vpack.c.b16 %v1620, %v1619
        %v1638 = vpack.c.b16 %v1622, %v1621
        %1655 = vmatprep.subr.bf16.mxu0 0
        %1656 = vmatpush1.bf16.msra.mxu0 %v1630
        %1657 = vmatprep.subr.bf16.mxu0 0
        %1658 = vmatpush1.bf16.msra.mxu0 %v1629
        %1659 = vmatprep.subr.bf16.mxu0 0
        %1660 = vmatpush1.bf16.msra.mxu0 %v1628
        %1661 = vmatprep.subr.bf16.mxu0 0
        %1662 = vmatpush1.bf16.msra.mxu0 %v1627
        %1663 = vmatprep.subr.bf16.mxu0 0
        %1664 = vmatpush1.bf16.msra.mxu0 %v1626
        %1665 = vmatprep.subr.bf16.mxu0 0
        %1666 = vmatpush1.bf16.msra.mxu0 %v1625
        %1667 = vmatprep.subr.bf16.mxu0 0
        %1668 = vmatpush1.bf16.msra.mxu0 %v1624
        %1669 = vmatprep.subr.bf16.mxu0 0
        %1670 = vmatpush1.bf16.msra.mxu0 %v1623
        %1671 = vmatprep.subr.bf16.mxu0 0
        %1672 = vmatpush2.bf16.msra.mxu0 %v1638
        %1673 = vmatprep.subr.bf16.mxu0 0
        %1674 = vmatpush2.bf16.msra.mxu0 %v1637
        %1675 = vmatprep.subr.bf16.mxu0 0
        %1676 = vmatpush2.bf16.msra.mxu0 %v1636
        %1677 = vmatprep.subr.bf16.mxu0 0
        %1678 = vmatpush2.bf16.msra.mxu0 %v1635
        %1679 = vmatprep.subr.bf16.mxu0 0
        %1680 = vmatpush2.bf16.msra.mxu0 %v1634
        %1681 = vmatprep.subr.bf16.mxu0 0
        %1682 = vmatpush2.bf16.msra.mxu0 %v1633
        %1683 = vmatprep.subr.bf16.mxu0 0
        %1684 = vmatpush2.bf16.msra.mxu0 %v1632
        %1685 = vmatprep.subr.bf16.mxu0 0
        %1686 = vmatpush2.bf16.msra.mxu0 %v1631
        %1687 = vmatprep.mubr.bf16.mxu0 %v1513
        %1688 = vmatmul.mubr.bf16.gmra.mxu0 %v1512
        %v1689 = vpop.f32.mrf.mxu0
        %v1690 = vadd.f32 %v1557, %v1689
        %v1691 = vpop.f32.mrf.mxu0
        %v1692 = vpop.f32.mrf.mxu0
        %v1693 = vadd.f32 %v1557, %v1692
        %v1694 = vpop.f32.mrf.mxu0
        %1695 = vmatprep.mubr.bf16.mxu0 %v1515
        %1696 = vmatmul.mubr.bf16.gmra.mxu0 %v1514
        %v1697 = vpop.f32.mrf.mxu0
        %v1698 = vadd.f32 %v1557, %v1697
        %v1699 = vpop.f32.mrf.mxu0
        %v1700 = vpop.f32.mrf.mxu0
        %v1701 = vadd.f32 %v1557, %v1700
        %v1702 = vpop.f32.mrf.mxu0
        %1703 = vmatprep.mubr.bf16.mxu0 %v1517
        %1704 = vmatmul.mubr.bf16.gmra.mxu0 %v1516
        %v1705 = vpop.f32.mrf.mxu0
        %v1706 = vadd.f32 %v1557, %v1705
        %v1707 = vpop.f32.mrf.mxu0
        %v1708 = vpop.f32.mrf.mxu0
        %v1709 = vadd.f32 %v1557, %v1708
        %v1710 = vpop.f32.mrf.mxu0
        %1711 = vmatprep.mubr.bf16.mxu0 %v1519
        %1712 = vmatmul.mubr.bf16.gmra.mxu0 %v1518
        %v1713 = vpop.f32.mrf.mxu0
        %v1714 = vadd.f32 %v1557, %v1713
        %v1715 = vpop.f32.mrf.mxu0
        %v1716 = vpop.f32.mrf.mxu0
        %v1717 = vadd.f32 %v1557, %v1716
        %v1718 = vpop.f32.mrf.mxu0
        %1719 = vdwg.mxu0
        %1720 = vst [vmem:[%s432] sm:$0xff] %v1690
        %1721 = vst [vmem:[%s432 + $0x8] sm:$0xff] %v1693
        %1722 = vst [vmem:[%s432 + $0x10] sm:$0xff] %v1698
        %1723 = vst [vmem:[%s432 + $0x18] sm:$0xff] %v1701
        %1724 = vst [vmem:[%s432 + $0x20] sm:$0xff] %v1706
        %1725 = vst [vmem:[%s432 + $0x28] sm:$0xff] %v1709
        %1726 = vst [vmem:[%s432 + $0x30] sm:$0xff] %v1714
        %1727 = vst [vmem:[%s432 + $0x38] sm:$0xff] %v1717
        %s1728 = smul.u32 8, %s24
        %p1729 = scmp.lt.s32.totalorder %s1728, 15
        %s1730 = scalar_select %p1729, %s1728, 15
        %s1731 = smul.addr %s1730, 8
        %s1732 = scalar_lea.vmem %s11, %s1731
        // Predicated region
        $region77: #{mlp_refiner_forward.1} parent=63 // pred_check
          %p1733 = pneg %p278
        $region78: #{mlp_refiner_forward.1} parent=63 // pred_check_branch
          %1735 = sbr.rel (%p1733) target = $region80
        $region79: #{mlp_refiner_forward.1} parent=63 // pred_region
          %s1736 = smul.u32 8, %s24
        $region80: #{mlp_refiner_forward.1} parent=63 // pred_fallthru
          _
      $region64: #{mlp_refiner_forward.1} parent=5 // pred_fallthru
        _
      %p1737 = scmp.le.s32.totalorder 2, %s19
      // Predicated region
      $region81: #{mlp_refiner_forward.1} parent=5 // pred_check
        %p1738 = pneg %p1737
      $region82: #{mlp_refiner_forward.1} parent=5 // pred_check_branch
        %1740 = sbr.rel (%p1738) target = $region84
      $region83: #{mlp_refiner_forward.1} parent=5 // pred_region
        %s1741 = ssub.s32 %s19, 2
        // Predicated region
        $region85: #{mlp_refiner_forward.1} parent=83 // pred_check
          %p1742 = pneg %p284
        $region86: #{mlp_refiner_forward.1} parent=83 // pred_check_branch
          %1744 = sbr.rel (%p1742) target = $region88
        $region87: #{mlp_refiner_forward.1} parent=83 // pred_region
          %s1745 = smul.u32 8, %s25
          %p1746 = scmp.lt.s32.totalorder %s1745, 15
          %s1747 = scalar_select %p1746, %s1745, 15
          %s1748 = smul.addr %s1747, 8
          %s1749 = scalar_lea.vmem %s11, %s1748
        $region88: #{mlp_refiner_forward.1} parent=83 // pred_fallthru
          _
      $region84: #{mlp_refiner_forward.1} parent=5 // pred_fallthru
        _
    $region6: #{mlp_refiner_forward.1} parent=1 // loop_footer
      %s23 = sadd.s32 1, %s19
    $region7: #{mlp_refiner_forward.1} parent=1 // loop_footer_branch
      %18 = sbr.rel target = $region3
    $region8: #{mlp_refiner_forward.1} parent=1 // loop_exit
      _
    %1750 = vsyncpa [#allocation3], 1
    %s1751 = scalar_lea.sflag [#allocation3], 1
    %1752 = vsyncpa %s1751, 1
    %1753 = vsyncpa [#allocation5], 1

</llo_original>
